<compile_context>
chip_gen: v7x
topology: tpu7x:2x2x1
jax: 0.10.0
libtpu: 0.0.40
codegen_flags: <defaults>
</compile_context>

<pallas_src>
import functools

import jax
import jax.numpy as jnp
from jax.experimental import pallas as pl
from jax.experimental.pallas import tpu as pltpu


def _round_up(n, m):
    return ((n + m - 1) // m) * m


def _conv_caps_kernel(x_ref, w_ref, b_ref, g_ref, o_ref, *, kh, kw, w_pal, fuse_squash):
    # x_ref: (1, C_inp, L_in)   zero-padded image, rows flattened on lanes, pitch w_pal
    # w_ref: (kh*kw, C_out, C_inp) per-tap weights; b_ref: (C_out, 1) f32 bias
    # g_ref: (128, 128) f32 block-diagonal grouping matrix (8x8 blocks of ones)
    # o_ref: (1, C_out, L_out)  conv(+squash) on the dense padded spatial grid
    c_out, l_out = o_ref.shape[1], o_ref.shape[2]
    acc = jnp.zeros((c_out, l_out), jnp.float32)
    # In-kernel im2col: each tap is a static lane shift of the flattened image,
    # accumulated with a small MXU matmul (f32 accumulation).
    for i in range(kh):
        for j in range(kw):
            shift = i * w_pal + j
            x_tap = x_ref[0, :, pl.ds(shift, l_out)]          # (C_inp, L_out)
            w_tap = w_ref[i * kw + j]                          # (C_out, C_inp)
            acc = acc + jnp.dot(w_tap, x_tap, preferred_element_type=jnp.float32)
    acc = acc + b_ref[...].astype(jnp.float32)

    if fuse_squash:
        # Each capsule = 8 consecutive, 8-aligned lanes (w_pal % 8 == 0, W_out % 8 == 0),
        # so a 128-wide G per 128-lane slice broadcast-reduces the capsule norm exactly.
        g = g_ref[...]
        for c in range(l_out // 128):
            a = acc[:, c * 128:(c + 1) * 128]
            sn = jnp.dot(a * a, g, preferred_element_type=jnp.float32)
            # squash: sn/(1+sn) * x/sqrt(sn) == x*sqrt(sn)/(1+sn); NaN-free at sn == 0.
            o_ref[0, :, pl.ds(c * 128, 128)] = (
                a * jnp.sqrt(sn) * pl.reciprocal(1.0 + sn)).astype(o_ref.dtype)
    else:
        o_ref[0] = acc.astype(o_ref.dtype)


def _squash_rows_kernel(x_ref, o_ref):
    x = x_ref[...].astype(jnp.float32)
    sn = jnp.sum(x * x, axis=-1, keepdims=True)
    o_ref[...] = (x * jnp.sqrt(sn) * pl.reciprocal(1.0 + sn)).astype(o_ref.dtype)


def _squash_rows(x2d):
    # Cold fallback (stride != 1 or W_out % 8 != 0): lane-sparse width-8 stores.
    # TODO(synk): lane-dense layout for this path if it ever gets hot.
    M, D = x2d.shape
    bm = 512
    m_pad = _round_up(M, bm)
    xp = jnp.pad(x2d, ((0, m_pad - M), (0, 0))) if m_pad != M else x2d
    out = pl.pallas_call(
        _squash_rows_kernel,
        out_shape=jax.ShapeDtypeStruct((m_pad, D), x2d.dtype),
        grid=(m_pad // bm,),
        in_specs=[pl.BlockSpec((bm, D), lambda i: (i, 0))],
        out_specs=pl.BlockSpec((bm, D), lambda i: (i, 0)),
        compiler_params=pltpu.CompilerParams(dimension_semantics=("parallel",)),
    )(xp)
    return out[:M] if m_pad != M else out


@functools.partial(jax.jit, static_argnames=("stride", "padding", "compute_dtype"))
def primary_capsules_forward(x, weight, bias, *, stride, padding,
                             compute_dtype=jnp.float32):
    """x: (B, C_in, H, W); weight: (C_out, C_in, kh, kw); bias: (C_out,)."""
    B, C_in, H, W = x.shape
    C_out, _, kh, kw = weight.shape
    H_out = (H + 2 * padding - kh) // stride + 1
    W_out = (W + 2 * padding - kw) // stride + 1
    HW = H_out * W_out
    total = C_out * HW
    assert total % 8 == 0, "view(B, -1, 8) requires C_out*H_out*W_out % 8 == 0"

    H_pad, W_pad = H + 2 * padding, W + 2 * padding
    W_pal = _round_up(W_pad, 8)        # 8-aligned row pitch -> capsules = lane octets
    C_inp = _round_up(C_in, 8)         # aligned MXU contraction dim

    R_need = (H_out - 1) * stride + 1                       # dense (stride-1) rows
    L_out = _round_up(R_need * W_pal, 128)                  # lane-dense output extent
    max_shift = (kh - 1) * W_pal + (kw - 1)
    L_in = _round_up(max(H_pad * W_pal, L_out + max_shift), 128)

    fuse = (stride == 1) and (W_out % 8 == 0)
    assert (not fuse) or (W_pal % 8 == 0), "capsule octets must be 8-lane aligned"

    # The ONLY copy of the input that reaches HBM: conv zero-padding + pitch/channel
    # alignment, rows flattened onto the lane axis (pure pad + metadata reshape).
    xp = jnp.pad(x, ((0, 0), (0, C_inp - C_in),
                     (padding, padding), (padding, padding + W_pal - W_pad)))
    xflat = xp.reshape(B, C_inp, H_pad * W_pal)
    if L_in > H_pad * W_pal:
        xflat = jnp.pad(xflat, ((0, 0), (0, 0), (0, L_in - H_pad * W_pal)))
    xflat = xflat.astype(compute_dtype)

    w_taps = jnp.pad(weight, ((0, 0), (0, C_inp - C_in), (0, 0), (0, 0)))
    w_taps = w_taps.transpose(2, 3, 0, 1).reshape(kh * kw, C_out, C_inp)
    w_taps = w_taps.astype(compute_dtype)
    bias2d = bias.reshape(C_out, 1).astype(jnp.float32)

    lane = jnp.arange(128)
    group = (lane[:, None] // 8 == lane[None, :] // 8).astype(jnp.float32)  # (128,128)

    esize = jnp.dtype(compute_dtype).itemsize
    cost = pl.CostEstimate(
        flops=2 * B * C_out * C_inp * kh * kw * L_out
              + (2 * B * C_out * 128 * L_out if fuse else 0),
        transcendentals=(2 * B * C_out * L_out) if fuse else 0,
        bytes_accessed=B * C_inp * L_in * esize
                       + kh * kw * C_out * C_inp * esize
                       + B * C_out * L_out * x.dtype.itemsize)

    out_full = pl.pallas_call(
        functools.partial(_conv_caps_kernel, kh=kh, kw=kw, w_pal=W_pal,
                          fuse_squash=fuse),
        out_shape=jax.ShapeDtypeStruct((B, C_out, L_out), x.dtype),
        grid=(B,),
        in_specs=[
            # Whole flattened image per batch step (read once; next batch prefetched).
            pl.BlockSpec((1, C_inp, L_in), lambda b: (b, 0, 0)),
            # Grid-invariant operands: constant index_map -> DMA'd once, never refetched.
            # TODO(synk): pipeline_mode=pl.Buffered(1) would also drop their 2nd VMEM
            # buffer (matters for CapsNet-scale weights under v7x's 64 MiB VMEM).
            pl.BlockSpec((kh * kw, C_out, C_inp), lambda b: (0, 0, 0)),
            pl.BlockSpec((C_out, 1), lambda b: (0, 0)),
            pl.BlockSpec((128, 128), lambda b: (0, 0)),
        ],
        out_specs=pl.BlockSpec((1, C_out, L_out), lambda b: (b, 0, 0)),
        compiler_params=pltpu.CompilerParams(
            dimension_semantics=("parallel",),
            vmem_limit_bytes=32 * 1024 * 1024),
        cost_estimate=cost,
    )(xflat, w_taps, bias2d, group)

    # Extract valid (strided) outputs — output-sized slice — then view(B,-1,8) is free.
    conv = out_full[:, :, :R_need * W_pal].reshape(B, C_out, R_need, W_pal)
    conv = conv[:, :, ::stride, ::stride][:, :, :H_out, :W_out]
    caps = conv.reshape(B, total // 8, 8)
    if fuse:
        return caps
    # TODO(synk): stride > 1 recomputes the conv on the stride-1 grid (stride^2 extra
    # MXU work) and squashes in a second kernel; move strided taps in-kernel if hot.
    return _squash_rows(caps.reshape(-1, 8)).reshape(B, total // 8, 8)


def init_params(key, in_channels, out_channels, kernel_size):
    """Deterministic init mimicking nn.Conv2d defaults (kaiming-uniform-ish)."""
    kw_key, kb_key = jax.random.split(key)
    fan_in = in_channels * kernel_size * kernel_size
    bound = 1.0 / jnp.sqrt(float(fan_in))
    weight = jax.random.uniform(
        kw_key, (out_channels, in_channels, kernel_size, kernel_size),
        minval=-bound, maxval=bound, dtype=jnp.float32)
    bias = jax.random.uniform(
        kb_key, (out_channels,), minval=-bound, maxval=bound, dtype=jnp.float32)
    return weight, bias


def _reference(x, weight, bias, stride, padding):
    """Pure-JAX reference of the PyTorch forward."""
    out = jax.lax.conv_general_dilated(
        x, weight, window_strides=(stride, stride),
        padding=((padding, padding), (padding, padding)),
        dimension_numbers=("NCHW", "OIHW", "NCHW"))
    out = out + bias.reshape(1, -1, 1, 1)
    caps = out.reshape(out.shape[0], -1, 8)
    sn = jnp.sum(caps * caps, axis=-1, keepdims=True)
    # == (sn/(1+sn)) * caps / sqrt(sn), but NaN-free at sn == 0.
    return caps * jnp.sqrt(sn) / (1.0 + sn)


if __name__ == "__main__":
    in_channels, out_channels, kernel_size, stride, padding = 4, 8, 3, 1, 1
    B, H, W = 2, 16, 16

    key = jax.random.PRNGKey(0)
    k_x, k_p = jax.random.split(key)
    x = jax.random.normal(k_x, (B, in_channels, H, W), dtype=jnp.float32)
    weight, bias = init_params(k_p, in_channels, out_channels, kernel_size)

    ref = jax.block_until_ready(_reference(x, weight, bias, stride, padding))

    # f32-operand path: preserves the PyTorch module's numerics.
    out = primary_capsules_forward(x, weight, bias, stride=stride, padding=padding)
    out = jax.block_until_ready(out)
    assert out.shape == (B, out_channels * H * W // 8, 8), out.shape
    err = float(jnp.max(jnp.abs(out - ref)))
    assert jnp.allclose(out, ref, atol=1e-4, rtol=1e-4), err

    # bf16-operand path (f32 accumulation) from the perf review; looser tolerance.
    out_bf = primary_capsules_forward(x, weight, bias, stride=stride, padding=padding,
                                      compute_dtype=jnp.bfloat16)
    out_bf = jax.block_until_ready(out_bf)
    err_bf = float(jnp.max(jnp.abs(out_bf - ref)))
    assert jnp.allclose(out_bf, ref, atol=2e-2, rtol=2e-2), err_bf

    print("KERNEL_OK")
</pallas_src>

<mosaic_0001>
module attributes {stable_mosaic.version = 11 : i64} {
  func.func @_conv_caps_kernel(%arg0: i32, %arg1: memref<1x8x512xf32, #tpu.memory_space<vmem>>, %arg2: memref<9x8x8xf32, #tpu.memory_space<vmem>>, %arg3: memref<8x1xf32, #tpu.memory_space<vmem>>, %arg4: memref<128x128xf32, #tpu.memory_space<vmem>>, %arg5: memref<1x8x384xf32, #tpu.memory_space<vmem>>) attributes {dimension_semantics = [#tpu.dimension_semantics<parallel>], iteration_bounds = array<i64: 2>, scalar_prefetch = 0 : i64, scratch_operands = 0 : i64, tpu.core_type = #tpu.core_type<tc>, window_params = [{transform_indices = @transform_0, window_bounds = array<i64: 1, 8, 512>}, {pipeline_mode = #tpu.pipeline_mode<synchronous>, transform_indices = @transform_1, window_bounds = array<i64: 9, 8, 8>}, {pipeline_mode = #tpu.pipeline_mode<synchronous>, transform_indices = @transform_2, window_bounds = array<i64: 8, 1>}, {pipeline_mode = #tpu.pipeline_mode<synchronous>, transform_indices = @transform_3, window_bounds = array<i64: 128, 128>}, {transform_indices = @transform_4, window_bounds = array<i64: 1, 8, 384>}]} {
    %cst = arith.constant 0.000000e+00 : f32
    %0 = vector.broadcast %cst : f32 to vector<8x384xf32>
    %c0 = arith.constant 0 : index
    %c0_0 = arith.constant 0 : index
    %c0_1 = arith.constant 0 : index
    %1 = vector.load %arg1[%c0, %c0_0, %c0_1] : memref<1x8x512xf32, #tpu.memory_space<vmem>>, vector<1x8x384xf32>
    %2 = vector.shape_cast %1 : vector<1x8x384xf32> to vector<8x384xf32>
    %c0_2 = arith.constant 0 : index
    %c0_3 = arith.constant 0 : index
    %c0_4 = arith.constant 0 : index
    %3 = vector.load %arg2[%c0_2, %c0_3, %c0_4] : memref<9x8x8xf32, #tpu.memory_space<vmem>>, vector<1x8x8xf32>
    %4 = vector.shape_cast %3 : vector<1x8x8xf32> to vector<8x8xf32>
    %cst_5 = arith.constant dense<0.000000e+00> : vector<8x384xf32>
    %5 = tpu.matmul %4, %2, %cst_5 {dimension_numbers = #tpu.dot_dimension_numbers<[1], [0], [0], [1], [0, 0, 1, 1], [], []>} : vector<8x8xf32>, vector<8x384xf32>, vector<8x384xf32> -> vector<8x384xf32>
    %6 = arith.addf %0, %5 : vector<8x384xf32>
    %c0_6 = arith.constant 0 : index
    %c0_7 = arith.constant 0 : index
    %c1 = arith.constant 1 : index
    %7 = vector.load %arg1[%c0_6, %c0_7, %c1] : memref<1x8x512xf32, #tpu.memory_space<vmem>>, vector<1x8x384xf32>
    %8 = vector.shape_cast %7 : vector<1x8x384xf32> to vector<8x384xf32>
    %c1_8 = arith.constant 1 : index
    %c0_9 = arith.constant 0 : index
    %c0_10 = arith.constant 0 : index
    %9 = vector.load %arg2[%c1_8, %c0_9, %c0_10] : memref<9x8x8xf32, #tpu.memory_space<vmem>>, vector<1x8x8xf32>
    %10 = vector.shape_cast %9 : vector<1x8x8xf32> to vector<8x8xf32>
    %cst_11 = arith.constant dense<0.000000e+00> : vector<8x384xf32>
    %11 = tpu.matmul %10, %8, %cst_11 {dimension_numbers = #tpu.dot_dimension_numbers<[1], [0], [0], [1], [0, 0, 1, 1], [], []>} : vector<8x8xf32>, vector<8x384xf32>, vector<8x384xf32> -> vector<8x384xf32>
    %12 = arith.addf %6, %11 : vector<8x384xf32>
    %c0_12 = arith.constant 0 : index
    %c0_13 = arith.constant 0 : index
    %c2 = arith.constant 2 : index
    %13 = vector.load %arg1[%c0_12, %c0_13, %c2] : memref<1x8x512xf32, #tpu.memory_space<vmem>>, vector<1x8x384xf32>
    %14 = vector.shape_cast %13 : vector<1x8x384xf32> to vector<8x384xf32>
    %c2_14 = arith.constant 2 : index
    %c0_15 = arith.constant 0 : index
    %c0_16 = arith.constant 0 : index
    %15 = vector.load %arg2[%c2_14, %c0_15, %c0_16] : memref<9x8x8xf32, #tpu.memory_space<vmem>>, vector<1x8x8xf32>
    %16 = vector.shape_cast %15 : vector<1x8x8xf32> to vector<8x8xf32>
    %cst_17 = arith.constant dense<0.000000e+00> : vector<8x384xf32>
    %17 = tpu.matmul %16, %14, %cst_17 {dimension_numbers = #tpu.dot_dimension_numbers<[1], [0], [0], [1], [0, 0, 1, 1], [], []>} : vector<8x8xf32>, vector<8x384xf32>, vector<8x384xf32> -> vector<8x384xf32>
    %18 = arith.addf %12, %17 : vector<8x384xf32>
    %c0_18 = arith.constant 0 : index
    %c0_19 = arith.constant 0 : index
    %c24 = arith.constant 24 : index
    %19 = vector.load %arg1[%c0_18, %c0_19, %c24] : memref<1x8x512xf32, #tpu.memory_space<vmem>>, vector<1x8x384xf32>
    %20 = vector.shape_cast %19 : vector<1x8x384xf32> to vector<8x384xf32>
    %c3 = arith.constant 3 : index
    %c0_20 = arith.constant 0 : index
    %c0_21 = arith.constant 0 : index
    %21 = vector.load %arg2[%c3, %c0_20, %c0_21] : memref<9x8x8xf32, #tpu.memory_space<vmem>>, vector<1x8x8xf32>
    %22 = vector.shape_cast %21 : vector<1x8x8xf32> to vector<8x8xf32>
    %cst_22 = arith.constant dense<0.000000e+00> : vector<8x384xf32>
    %23 = tpu.matmul %22, %20, %cst_22 {dimension_numbers = #tpu.dot_dimension_numbers<[1], [0], [0], [1], [0, 0, 1, 1], [], []>} : vector<8x8xf32>, vector<8x384xf32>, vector<8x384xf32> -> vector<8x384xf32>
    %24 = arith.addf %18, %23 : vector<8x384xf32>
    %c0_23 = arith.constant 0 : index
    %c0_24 = arith.constant 0 : index
    %c25 = arith.constant 25 : index
    %25 = vector.load %arg1[%c0_23, %c0_24, %c25] : memref<1x8x512xf32, #tpu.memory_space<vmem>>, vector<1x8x384xf32>
    %26 = vector.shape_cast %25 : vector<1x8x384xf32> to vector<8x384xf32>
    %c4 = arith.constant 4 : index
    %c0_25 = arith.constant 0 : index
    %c0_26 = arith.constant 0 : index
    %27 = vector.load %arg2[%c4, %c0_25, %c0_26] : memref<9x8x8xf32, #tpu.memory_space<vmem>>, vector<1x8x8xf32>
    %28 = vector.shape_cast %27 : vector<1x8x8xf32> to vector<8x8xf32>
    %cst_27 = arith.constant dense<0.000000e+00> : vector<8x384xf32>
    %29 = tpu.matmul %28, %26, %cst_27 {dimension_numbers = #tpu.dot_dimension_numbers<[1], [0], [0], [1], [0, 0, 1, 1], [], []>} : vector<8x8xf32>, vector<8x384xf32>, vector<8x384xf32> -> vector<8x384xf32>
    %30 = arith.addf %24, %29 : vector<8x384xf32>
    %c0_28 = arith.constant 0 : index
    %c0_29 = arith.constant 0 : index
    %c26 = arith.constant 26 : index
    %31 = vector.load %arg1[%c0_28, %c0_29, %c26] : memref<1x8x512xf32, #tpu.memory_space<vmem>>, vector<1x8x384xf32>
    %32 = vector.shape_cast %31 : vector<1x8x384xf32> to vector<8x384xf32>
    %c5 = arith.constant 5 : index
    %c0_30 = arith.constant 0 : index
    %c0_31 = arith.constant 0 : index
    %33 = vector.load %arg2[%c5, %c0_30, %c0_31] : memref<9x8x8xf32, #tpu.memory_space<vmem>>, vector<1x8x8xf32>
    %34 = vector.shape_cast %33 : vector<1x8x8xf32> to vector<8x8xf32>
    %cst_32 = arith.constant dense<0.000000e+00> : vector<8x384xf32>
    %35 = tpu.matmul %34, %32, %cst_32 {dimension_numbers = #tpu.dot_dimension_numbers<[1], [0], [0], [1], [0, 0, 1, 1], [], []>} : vector<8x8xf32>, vector<8x384xf32>, vector<8x384xf32> -> vector<8x384xf32>
    %36 = arith.addf %30, %35 : vector<8x384xf32>
    %c0_33 = arith.constant 0 : index
    %c0_34 = arith.constant 0 : index
    %c48 = arith.constant 48 : index
    %37 = vector.load %arg1[%c0_33, %c0_34, %c48] : memref<1x8x512xf32, #tpu.memory_space<vmem>>, vector<1x8x384xf32>
    %38 = vector.shape_cast %37 : vector<1x8x384xf32> to vector<8x384xf32>
    %c6 = arith.constant 6 : index
    %c0_35 = arith.constant 0 : index
    %c0_36 = arith.constant 0 : index
    %39 = vector.load %arg2[%c6, %c0_35, %c0_36] : memref<9x8x8xf32, #tpu.memory_space<vmem>>, vector<1x8x8xf32>
    %40 = vector.shape_cast %39 : vector<1x8x8xf32> to vector<8x8xf32>
    %cst_37 = arith.constant dense<0.000000e+00> : vector<8x384xf32>
    %41 = tpu.matmul %40, %38, %cst_37 {dimension_numbers = #tpu.dot_dimension_numbers<[1], [0], [0], [1], [0, 0, 1, 1], [], []>} : vector<8x8xf32>, vector<8x384xf32>, vector<8x384xf32> -> vector<8x384xf32>
    %42 = arith.addf %36, %41 : vector<8x384xf32>
    %c0_38 = arith.constant 0 : index
    %c0_39 = arith.constant 0 : index
    %c49 = arith.constant 49 : index
    %43 = vector.load %arg1[%c0_38, %c0_39, %c49] : memref<1x8x512xf32, #tpu.memory_space<vmem>>, vector<1x8x384xf32>
    %44 = vector.shape_cast %43 : vector<1x8x384xf32> to vector<8x384xf32>
    %c7 = arith.constant 7 : index
    %c0_40 = arith.constant 0 : index
    %c0_41 = arith.constant 0 : index
    %45 = vector.load %arg2[%c7, %c0_40, %c0_41] : memref<9x8x8xf32, #tpu.memory_space<vmem>>, vector<1x8x8xf32>
    %46 = vector.shape_cast %45 : vector<1x8x8xf32> to vector<8x8xf32>
    %cst_42 = arith.constant dense<0.000000e+00> : vector<8x384xf32>
    %47 = tpu.matmul %46, %44, %cst_42 {dimension_numbers = #tpu.dot_dimension_numbers<[1], [0], [0], [1], [0, 0, 1, 1], [], []>} : vector<8x8xf32>, vector<8x384xf32>, vector<8x384xf32> -> vector<8x384xf32>
    %48 = arith.addf %42, %47 : vector<8x384xf32>
    %c0_43 = arith.constant 0 : index
    %c0_44 = arith.constant 0 : index
    %c50 = arith.constant 50 : index
    %49 = vector.load %arg1[%c0_43, %c0_44, %c50] : memref<1x8x512xf32, #tpu.memory_space<vmem>>, vector<1x8x384xf32>
    %50 = vector.shape_cast %49 : vector<1x8x384xf32> to vector<8x384xf32>
    %c8 = arith.constant 8 : index
    %c0_45 = arith.constant 0 : index
    %c0_46 = arith.constant 0 : index
    %51 = vector.load %arg2[%c8, %c0_45, %c0_46] : memref<9x8x8xf32, #tpu.memory_space<vmem>>, vector<1x8x8xf32>
    %52 = vector.shape_cast %51 : vector<1x8x8xf32> to vector<8x8xf32>
    %cst_47 = arith.constant dense<0.000000e+00> : vector<8x384xf32>
    %53 = tpu.matmul %52, %50, %cst_47 {dimension_numbers = #tpu.dot_dimension_numbers<[1], [0], [0], [1], [0, 0, 1, 1], [], []>} : vector<8x8xf32>, vector<8x384xf32>, vector<8x384xf32> -> vector<8x384xf32>
    %54 = arith.addf %48, %53 : vector<8x384xf32>
    %c0_48 = arith.constant 0 : index
    %c0_49 = arith.constant 0 : index
    %55 = vector.load %arg3[%c0_48, %c0_49] : memref<8x1xf32, #tpu.memory_space<vmem>>, vector<8x1xf32>
    %56 = vector.broadcast %55 : vector<8x1xf32> to vector<8x384xf32>
    %57 = arith.addf %54, %56 : vector<8x384xf32>
    %c0_50 = arith.constant 0 : index
    %c0_51 = arith.constant 0 : index
    %58 = vector.load %arg4[%c0_50, %c0_51] : memref<128x128xf32, #tpu.memory_space<vmem>>, vector<128x128xf32>
    %59 = vector.extract_strided_slice %57 {offsets = [0, 0], sizes = [8, 128], strides = [1, 1]} : vector<8x384xf32> to vector<8x128xf32>
    %60 = arith.mulf %59, %59 : vector<8x128xf32>
    %cst_52 = arith.constant dense<0.000000e+00> : vector<8x128xf32>
    %61 = tpu.matmul %60, %58, %cst_52 {dimension_numbers = #tpu.dot_dimension_numbers<[1], [0], [0], [1], [0, 0, 1, 1], [], []>} : vector<8x128xf32>, vector<128x128xf32>, vector<8x128xf32> -> vector<8x128xf32>
    %62 = math.sqrt %61 : vector<8x128xf32>
    %63 = arith.mulf %59, %62 : vector<8x128xf32>
    %cst_53 = arith.constant 1.000000e+00 : f32
    %64 = vector.broadcast %cst_53 : f32 to vector<8x128xf32>
    %65 = arith.addf %64, %61 : vector<8x128xf32>
    %66 = tpu.reciprocal %65 : vector<8x128xf32> -> vector<8x128xf32>
    %67 = arith.mulf %63, %66 : vector<8x128xf32>
    %c0_54 = arith.constant 0 : index
    %c0_55 = arith.constant 0 : index
    %c0_56 = arith.constant 0 : index
    %68 = vector.load %arg5[%c0_54, %c0_55, %c0_56] : memref<1x8x384xf32, #tpu.memory_space<vmem>>, vector<1x8x128xf32>
    %69 = vector.shape_cast %68 : vector<1x8x128xf32> to vector<8x128xf32>
    %70 = vector.shape_cast %67 : vector<8x128xf32> to vector<1x8x128xf32>
    tpu.vector_store %arg5[%c0_54, %c0_55, %c0_56], %70 {strides = array<i32>} : memref<1x8x384xf32, #tpu.memory_space<vmem>>, vector<1x8x128xf32>,
    %71 = vector.extract_strided_slice %57 {offsets = [0, 128], sizes = [8, 128], strides = [1, 1]} : vector<8x384xf32> to vector<8x128xf32>
    %72 = arith.mulf %71, %71 : vector<8x128xf32>
    %cst_57 = arith.constant dense<0.000000e+00> : vector<8x128xf32>
    %73 = tpu.matmul %72, %58, %cst_57 {dimension_numbers = #tpu.dot_dimension_numbers<[1], [0], [0], [1], [0, 0, 1, 1], [], []>} : vector<8x128xf32>, vector<128x128xf32>, vector<8x128xf32> -> vector<8x128xf32>
    %74 = math.sqrt %73 : vector<8x128xf32>
    %75 = arith.mulf %71, %74 : vector<8x128xf32>
    %cst_58 = arith.constant 1.000000e+00 : f32
    %76 = vector.broadcast %cst_58 : f32 to vector<8x128xf32>
    %77 = arith.addf %76, %73 : vector<8x128xf32>
    %78 = tpu.reciprocal %77 : vector<8x128xf32> -> vector<8x128xf32>
    %79 = arith.mulf %75, %78 : vector<8x128xf32>
    %c0_59 = arith.constant 0 : index
    %c0_60 = arith.constant 0 : index
    %c128 = arith.constant 128 : index
    %80 = vector.load %arg5[%c0_59, %c0_60, %c128] : memref<1x8x384xf32, #tpu.memory_space<vmem>>, vector<1x8x128xf32>
    %81 = vector.shape_cast %80 : vector<1x8x128xf32> to vector<8x128xf32>
    %82 = vector.shape_cast %79 : vector<8x128xf32> to vector<1x8x128xf32>
    tpu.vector_store %arg5[%c0_59, %c0_60, %c128], %82 {strides = array<i32>} : memref<1x8x384xf32, #tpu.memory_space<vmem>>, vector<1x8x128xf32>,
    %83 = vector.extract_strided_slice %57 {offsets = [0, 256], sizes = [8, 128], strides = [1, 1]} : vector<8x384xf32> to vector<8x128xf32>
    %84 = arith.mulf %83, %83 : vector<8x128xf32>
    %cst_61 = arith.constant dense<0.000000e+00> : vector<8x128xf32>
    %85 = tpu.matmul %84, %58, %cst_61 {dimension_numbers = #tpu.dot_dimension_numbers<[1], [0], [0], [1], [0, 0, 1, 1], [], []>} : vector<8x128xf32>, vector<128x128xf32>, vector<8x128xf32> -> vector<8x128xf32>
    %86 = math.sqrt %85 : vector<8x128xf32>
    %87 = arith.mulf %83, %86 : vector<8x128xf32>
    %cst_62 = arith.constant 1.000000e+00 : f32
    %88 = vector.broadcast %cst_62 : f32 to vector<8x128xf32>
    %89 = arith.addf %88, %85 : vector<8x128xf32>
    %90 = tpu.reciprocal %89 : vector<8x128xf32> -> vector<8x128xf32>
    %91 = arith.mulf %87, %90 : vector<8x128xf32>
    %c0_63 = arith.constant 0 : index
    %c0_64 = arith.constant 0 : index
    %c256 = arith.constant 256 : index
    %92 = vector.load %arg5[%c0_63, %c0_64, %c256] : memref<1x8x384xf32, #tpu.memory_space<vmem>>, vector<1x8x128xf32>
    %93 = vector.shape_cast %92 : vector<1x8x128xf32> to vector<8x128xf32>
    %94 = vector.shape_cast %91 : vector<8x128xf32> to vector<1x8x128xf32>
    tpu.vector_store %arg5[%c0_63, %c0_64, %c256], %94 {strides = array<i32>} : memref<1x8x384xf32, #tpu.memory_space<vmem>>, vector<1x8x128xf32>,
    return
  }
  func.func @transform_0(%arg0: i32) -> (i32, i32, i32) {
    %c0_i32 = arith.constant 0 : i32
    %c0_i32_0 = arith.constant 0 : i32
    %c0_i32_1 = arith.constant 0 : i32
    return %arg0, %c0_i32, %c0_i32_0 : i32, i32, i32
  }
  func.func @transform_1(%arg0: i32) -> (i32, i32, i32) {
    %c0_i32 = arith.constant 0 : i32
    %c0_i32_0 = arith.constant 0 : i32
    %c0_i32_1 = arith.constant 0 : i32
    %c0_i32_2 = arith.constant 0 : i32
    return %c0_i32, %c0_i32_0, %c0_i32_1 : i32, i32, i32
  }
  func.func @transform_2(%arg0: i32) -> (i32, i32) {
    %c0_i32 = arith.constant 0 : i32
    %c0_i32_0 = arith.constant 0 : i32
    %c0_i32_1 = arith.constant 0 : i32
    return %c0_i32, %c0_i32_0 : i32, i32
  }
  func.func @transform_3(%arg0: i32) -> (i32, i32) {
    %c0_i32 = arith.constant 0 : i32
    %c0_i32_0 = arith.constant 0 : i32
    %c0_i32_1 = arith.constant 0 : i32
    return %c0_i32, %c0_i32_0 : i32, i32
  }
  func.func @transform_4(%arg0: i32) -> (i32, i32, i32) {
    %c0_i32 = arith.constant 0 : i32
    %c0_i32_0 = arith.constant 0 : i32
    %c0_i32_1 = arith.constant 0 : i32
    return %arg0, %c0_i32, %c0_i32_0 : i32, i32, i32
  }
}

</mosaic_0001>

<llo_original>
// kernel: primary_capsules_forward.1
$region0: #{primary_capsules_forward.1}
  #allocation0 [shape = 'u32[]', space=smem, size = 0x4, offset = 0x4, fixed_abs, tag = 'smem constant byte address 0x4 - core index']
  #allocation1 [shape = 'u32[144,128]{1,0:T(1,128)}', space=vmem, size = 0x12000, scoped, tag = 'internal scratch']
  %s0 = inlined_call_operand.vmem [shape: f32[2,8,512], index: 0, kind: input, shape index: {}]
  %s1 = inlined_call_operand.vmem [shape: f32[9,8,8], index: 1, kind: input, shape index: {}]
  %s2 = inlined_call_operand.vmem [shape: f32[8,1], index: 2, kind: input, shape index: {}]
  %s3 = inlined_call_operand.vmem [shape: f32[128,128], index: 3, kind: input, shape index: {}]
  %s4 = inlined_call_operand.vmem [shape: f32[2,8,384], index: 4, kind: output, shape index: {}]
  %s5 = sld [smem:[#allocation0]]
  $region49: #{primary_capsules_forward.1} parent=0
    _
  %s7 = ssub.s32 1, %s5
  %s8 = scalar_select 0, %s7, %s5
  loop: start=0, step=1, limit=4
  $region2: #{primary_capsules_forward.1} parent=0 // loop_pre_header
    _
  $region3: #{primary_capsules_forward.1} parent=0 // loop_header
    %s10 = sphi 0, %s14
    %p11 = scmp.ge.s32.totalorder %s10, 4
    %s20 = sphi 0, %s22
    %s23 = sphi 0, %s20
    %s24 = sphi 0, %s23
    %s40 = sphi 0, %s24
    %s44 = sphi 0, %s44
    %s46 = sphi 0, %s44
    %s47 = sphi 0, %s46
    %s61 = sphi 0, %s47
    %s65 = sphi 0, %s65
    %s67 = sphi 0, %s65
    %s68 = sphi 0, %s67
    %s82 = sphi 0, %s68
    %s86 = sphi 0, %s86
    %s88 = sphi 0, %s86
    %s89 = sphi 0, %s88
    %s103 = sphi 0, %s89
    %s109 = sphi 0, %s111
    %s112 = sphi 0, %s109
    %s113 = sphi 0, %s112
    %s129 = sphi 0, %s113
  $region4: #{primary_capsules_forward.1} parent=0 // loop_header_branch
    %13 = sbr.rel (%p11) target = $region8
  $region5: #{primary_capsules_forward.1} parent=0 // loop_body
    %s15 = ssub.s32 %s10, 1
    %s16 = ssub.s32 %s10, 2
    %s17 = sadd.s32 %s10, 1
    %s18 = ssub.s32 %s10, %s17
    %p19 = scmp.eq.s32.totalorder %s18, 0
    %s21 = sadd.s32 %s20, 1
    %s22 = scalar_select %p19, %s20, %s21
    %p25 = pneg %p19
    %p26 = scmp.eq.s32.totalorder %s10, 1
    %p27 = por %p25, %p26
    %p28 = scmp.ne.s32.totalorder %s20, %s23
    %p29 = scmp.eq.s32.totalorder %s10, 0
    %p30 = por %p28, %p29
    %p31 = scmp.ne.s32.totalorder %s20, %s23
    %p32 = scmp.eq.s32.totalorder %s15, 1
    %p33 = por %p31, %p32
    %p34 = scmp.ne.s32.totalorder %s23, %s24
    %p35 = scmp.eq.s32.totalorder %s15, 0
    %p36 = por %p34, %p35
    %p37 = scmp.ne.s32.totalorder %s23, %s24
    %p38 = scmp.eq.s32.totalorder %s16, 1
    %p39 = por %p37, %p38
    %p41 = scmp.ne.s32.totalorder %s24, %s40
    %p42 = scmp.eq.s32.totalorder %s16, 0
    %p43 = por %p41, %p42
    %s45 = sadd.s32 %s44, 1
    %p48 = scmp.eq.s32.totalorder %s10, 1
    %p49 = scmp.ne.s32.totalorder %s44, %s46
    %p50 = scmp.eq.s32.totalorder %s10, 0
    %p51 = por %p49, %p50
    %p52 = scmp.ne.s32.totalorder %s44, %s46
    %p53 = scmp.eq.s32.totalorder %s15, 1
    %p54 = por %p52, %p53
    %p55 = scmp.ne.s32.totalorder %s46, %s47
    %p56 = scmp.eq.s32.totalorder %s15, 0
    %p57 = por %p55, %p56
    %p58 = scmp.ne.s32.totalorder %s46, %s47
    %p59 = scmp.eq.s32.totalorder %s16, 1
    %p60 = por %p58, %p59
    %p62 = scmp.ne.s32.totalorder %s47, %s61
    %p63 = scmp.eq.s32.totalorder %s16, 0
    %p64 = por %p62, %p63
    %s66 = sadd.s32 %s65, 1
    %p69 = scmp.eq.s32.totalorder %s10, 1
    %p70 = scmp.ne.s32.totalorder %s65, %s67
    %p71 = scmp.eq.s32.totalorder %s10, 0
    %p72 = por %p70, %p71
    %p73 = scmp.ne.s32.totalorder %s65, %s67
    %p74 = scmp.eq.s32.totalorder %s15, 1
    %p75 = por %p73, %p74
    %p76 = scmp.ne.s32.totalorder %s67, %s68
    %p77 = scmp.eq.s32.totalorder %s15, 0
    %p78 = por %p76, %p77
    %p79 = scmp.ne.s32.totalorder %s67, %s68
    %p80 = scmp.eq.s32.totalorder %s16, 1
    %p81 = por %p79, %p80
    %p83 = scmp.ne.s32.totalorder %s68, %s82
    %p84 = scmp.eq.s32.totalorder %s16, 0
    %p85 = por %p83, %p84
    %s87 = sadd.s32 %s86, 1
    %p90 = scmp.eq.s32.totalorder %s10, 1
    %p91 = scmp.ne.s32.totalorder %s86, %s88
    %p92 = scmp.eq.s32.totalorder %s10, 0
    %p93 = por %p91, %p92
    %p94 = scmp.ne.s32.totalorder %s86, %s88
    %p95 = scmp.eq.s32.totalorder %s15, 1
    %p96 = por %p94, %p95
    %p97 = scmp.ne.s32.totalorder %s88, %s89
    %p98 = scmp.eq.s32.totalorder %s15, 0
    %p99 = por %p97, %p98
    %p100 = scmp.ne.s32.totalorder %s88, %s89
    %p101 = scmp.eq.s32.totalorder %s16, 1
    %p102 = por %p100, %p101
    %p104 = scmp.ne.s32.totalorder %s89, %s103
    %p105 = scmp.eq.s32.totalorder %s16, 0
    %p106 = por %p104, %p105
    %s107 = ssub.s32 %s10, %s17
    %p108 = scmp.eq.s32.totalorder %s107, 0
    %s110 = sadd.s32 %s109, 1
    %s111 = scalar_select %p108, %s109, %s110
    %p114 = pneg %p108
    %p115 = scmp.eq.s32.totalorder %s10, 1
    %p116 = por %p114, %p115
    %p117 = scmp.ne.s32.totalorder %s109, %s112
    %p118 = scmp.eq.s32.totalorder %s10, 0
    %p119 = por %p117, %p118
    %p120 = scmp.ne.s32.totalorder %s109, %s112
    %p121 = scmp.eq.s32.totalorder %s15, 1
    %p122 = por %p120, %p121
    %p123 = scmp.ne.s32.totalorder %s112, %s113
    %p124 = scmp.eq.s32.totalorder %s15, 0
    %p125 = por %p123, %p124
    %p126 = scmp.ne.s32.totalorder %s112, %s113
    %p127 = scmp.eq.s32.totalorder %s16, 1
    %p128 = por %p126, %p127
    %p130 = scmp.ne.s32.totalorder %s113, %s129
    %p131 = scmp.eq.s32.totalorder %s16, 0
    %p132 = por %p130, %p131
    %p133 = scmp.le.s32.totalorder 1, %s10
    %p134 = scmp.lt.s32.totalorder %s10, 3
    %p135 = pnand %p133, %p134
    %p136 = pneg %p135
    // Predicated region
    $region9: #{primary_capsules_forward.1} parent=5 // pred_check
      _
    $region10: #{primary_capsules_forward.1} parent=5 // pred_check_branch
      %138 = sbr.rel (%p135) target = $region12
    $region11: #{primary_capsules_forward.1} parent=5 // pred_region
      %s139 = ssub.s32 %s10, 1
      // Predicated region
      $region13: #{primary_capsules_forward.1} parent=11 // pred_check
        %p140 = pneg %p57
      $region14: #{primary_capsules_forward.1} parent=11 // pred_check_branch
        %142 = sbr.rel (%p140) target = $region16
      $region15: #{primary_capsules_forward.1} parent=11 // pred_region
        _
      $region16: #{primary_capsules_forward.1} parent=11 // pred_fallthru
        _
      // Predicated region
      $region17: #{primary_capsules_forward.1} parent=11 // pred_check
        %p143 = pneg %p78
      $region18: #{primary_capsules_forward.1} parent=11 // pred_check_branch
        %145 = sbr.rel (%p143) target = $region20
      $region19: #{primary_capsules_forward.1} parent=11 // pred_region
        _
      $region20: #{primary_capsules_forward.1} parent=11 // pred_fallthru
        _
      // Predicated region
      $region21: #{primary_capsules_forward.1} parent=11 // pred_check
        %p146 = pneg %p99
      $region22: #{primary_capsules_forward.1} parent=11 // pred_check_branch
        %148 = sbr.rel (%p146) target = $region24
      $region23: #{primary_capsules_forward.1} parent=11 // pred_region
        _
      $region24: #{primary_capsules_forward.1} parent=11 // pred_fallthru
        _
    $region12: #{primary_capsules_forward.1} parent=5 // pred_fallthru
      _
    %p149 = scmp.lt.s32.totalorder %s10, 2
    // Predicated region
    $region25: #{primary_capsules_forward.1} parent=5 // pred_check
      %p150 = pneg %p149
    $region26: #{primary_capsules_forward.1} parent=5 // pred_check_branch
      %152 = sbr.rel (%p150) target = $region28
    $region27: #{primary_capsules_forward.1} parent=5 // pred_region
      // Predicated region
      $region29: #{primary_capsules_forward.1} parent=27 // pred_check
        %p153 = pneg %p30
      $region30: #{primary_capsules_forward.1} parent=27 // pred_check_branch
        %155 = sbr.rel (%p153) target = $region32
      $region31: #{primary_capsules_forward.1} parent=27 // pred_region
        %p156 = scmp.lt.s32.totalorder %s10, 1
        %s157 = scalar_select %p156, %s10, 1
        %s158 = smul.addr %s157, 4
        %s159 = smul.addr %s158, 8
        %s160 = scalar_lea.vmem %s0, %s159
      $region32: #{primary_capsules_forward.1} parent=27 // pred_fallthru
        _
    $region28: #{primary_capsules_forward.1} parent=5 // pred_fallthru
      _
    %p161 = scmp.le.s32.totalorder 1, %s10
    %p162 = scmp.lt.s32.totalorder %s10, 3
    %p163 = pnand %p161, %p162
    %p164 = pneg %p163
    // Predicated region
    $region33: #{primary_capsules_forward.1} parent=5 // pred_check
      _
    $region34: #{primary_capsules_forward.1} parent=5 // pred_check_branch
      %166 = sbr.rel (%p163) target = $region36
    $region35: #{primary_capsules_forward.1} parent=5 // pred_region
      %s167 = ssub.s32 %s10, 1
      %p168 = scmp.lt.s32.totalorder %s15, 1
      %s169 = scalar_select %p168, %s15, 1
      %s170 = smul.addr %s169, 4
      %s171 = smul.addr %s170, 8
      %s172 = scalar_lea.vmem %s0, %s171
      %p173 = pneg %p36
      %p174 = pneg %p33
      %p175 = pneg %p57
      %p176 = pneg %p54
      %p177 = pneg %p78
      %p178 = pneg %p75
      %p179 = pneg %p99
      %p180 = pneg %p96
      %p181 = pneg %p125
      %p182 = pneg %p122
      %p183 = scmp.lt.s32.totalorder %s15, 1
      %s184 = scalar_select %p183, %s15, 1
      %s185 = smul.addr %s184, 3
      %s186 = smul.addr %s185, 8
      %s187 = scalar_lea.vmem %s4, %s186
      %p188 = scmp.lt.s32.totalorder %s15, 1
      %s189 = scalar_select %p188, %s15, 1
      %s190 = smul.addr %s189, 4
      %s191 = smul.addr %s190, 8
      %s192 = scalar_lea.vmem %s0, %s191
      %p193 = scmp.lt.s32.totalorder %s15, 1
      %s194 = scalar_select %p193, %s15, 1
      %s195 = smul.addr %s194, 3
      %s196 = smul.addr %s195, 8
      %s197 = scalar_lea.vmem %s4, %s196
      %v198 = vld [vmem:[%s192] sm:$0xff]
      %v199 = vld [vmem:[%s192 + $0x8] sm:$0xff]
      %v200 = vld [vmem:[%s192 + $0x10] sm:$0xff]
      %v201 = vld [vmem:[%s1] sm:$0xff]
      %v202 = vld [vmem:[%s192] sm:$0xff]
      %v203 = vld [vmem:[%s192 + $0x8] sm:$0xff]
      %v204 = vld [vmem:[%s192 + $0x10] sm:$0xff]
      %v205 = vld [vmem:[%s192 + $0x18] sm:$0xff]
      %s206 = scalar_lea.vmem %s1, 8
      %v207 = vld [vmem:[%s206] sm:$0xff]
      %212 = vrot.lane.b32.xlu0 %v202, 127
      %v213 = vpop.permute.xlu0 %212
      %214 = vrot.lane.b32.xlu0 %v203, 127
      %v215 = vpop.permute.xlu0 %214
      %216 = vrot.lane.b32.xlu0 %v204, 127
      %v217 = vpop.permute.xlu0 %216
      %218 = vrot.lane.b32.xlu0 %v205, 127
      %v219 = vpop.permute.xlu0 %218
      %vm220 = vcmask 1039360
      %v221 = vsel %vm220, %v213, %v215
      %v222 = vsel %vm220, %v215, %v217
      %v223 = vsel %vm220, %v217, %v219
      %vm227 = vcmask 64512
      %v229 = vsel %vm227, %v207, 0
      %231 = vmatprep.subr.mxu0 %v222
      %232 = vmatpush1.msra.mxu0 %v221
      %233 = vmatprep.subr.mxu0 0.0
      %234 = vmatpush1.msra.mxu0 0.0
      %235 = vmatprep.subr.mxu0 0.0
      %236 = vmatpush1.msra.mxu0 0.0
      %237 = vmatprep.subr.mxu0 0.0
      %238 = vmatpush1.msra.mxu0 0.0
      %239 = vmatprep.subr.mxu0 0.0
      %240 = vmatpush1.msra.mxu0 0.0
      %241 = vmatprep.subr.mxu0 0.0
      %242 = vmatpush1.msra.mxu0 0.0
      %243 = vmatprep.subr.mxu0 0.0
      %244 = vmatpush1.msra.mxu0 0.0
      %245 = vmatprep.subr.mxu0 0.0
      %246 = vmatpush1.msra.mxu0 0.0
      %247 = vmatprep.subr.mxu0 0.0
      %248 = vmatpush1.msra.mxu0 0.0
      %249 = vmatprep.subr.mxu0 0.0
      %250 = vmatpush1.msra.mxu0 0.0
      %251 = vmatprep.subr.mxu0 0.0
      %252 = vmatpush1.msra.mxu0 0.0
      %253 = vmatprep.subr.mxu0 0.0
      %254 = vmatpush1.msra.mxu0 0.0
      %255 = vmatprep.subr.mxu0 0.0
      %256 = vmatpush1.msra.mxu0 0.0
      %257 = vmatprep.subr.mxu0 0.0
      %258 = vmatpush1.msra.mxu0 0.0
      %259 = vmatprep.subr.mxu0 0.0
      %260 = vmatpush1.msra.mxu0 0.0
      %261 = vmatprep.subr.mxu0 0.0
      %262 = vmatpush1.msra.mxu0 0.0
      %263 = vmatprep.subr.mxu0 0.0
      %264 = vmatpush1.msra.mxu0 0.0
      %265 = vmatprep.subr.mxu0 0.0
      %266 = vmatpush1.msra.mxu0 0.0
      %267 = vmatprep.subr.mxu0 0.0
      %268 = vmatpush1.msra.mxu0 0.0
      %269 = vmatprep.subr.mxu0 0.0
      %270 = vmatpush1.msra.mxu0 0.0
      %271 = vmatprep.subr.mxu0 0.0
      %272 = vmatpush1.msra.mxu0 0.0
      %273 = vmatprep.subr.mxu0 0.0
      %274 = vmatpush1.msra.mxu0 0.0
      %275 = vmatprep.subr.mxu0 0.0
      %276 = vmatpush1.msra.mxu0 0.0
      %277 = vmatprep.subr.mxu0 0.0
      %278 = vmatpush1.msra.mxu0 0.0
      %279 = vmatprep.subr.mxu0 0.0
      %280 = vmatpush1.msra.mxu0 0.0
      %281 = vmatprep.subr.mxu0 0.0
      %282 = vmatpush1.msra.mxu0 0.0
      %283 = vmatprep.subr.mxu0 0.0
      %284 = vmatpush1.msra.mxu0 0.0
      %285 = vmatprep.subr.mxu0 0.0
      %286 = vmatpush1.msra.mxu0 0.0
      %287 = vmatprep.subr.mxu0 0.0
      %288 = vmatpush1.msra.mxu0 0.0
      %289 = vmatprep.subr.mxu0 0.0
      %290 = vmatpush1.msra.mxu0 0.0
      %291 = vmatprep.subr.mxu0 0.0
      %292 = vmatpush1.msra.mxu0 0.0
      %293 = vmatprep.subr.mxu0 0.0
      %294 = vmatpush1.msra.mxu0 0.0
      %295 = vmatprep.mubr.f32.mxu0 0.0
      %296 = vmatmul.mubr.f32.gmra.mrb[0].mxu0 %v229
      %v297 = vpop.f32.mrb[0].mxu0
      %v298 = vadd.f32 0.0, %v297
      %v299 = vpop.f32.mrb[0].mxu0
      %v300 = vadd.f32 0.0, %v299
      %301 = vdwg.mxu0
      %302 = vmatprep.subr.mxu0 0.0
      %303 = vmatpush1.msra.mxu0 %v223
      %304 = vmatprep.subr.mxu0 0.0
      %305 = vmatpush1.msra.mxu0 0.0
      %306 = vmatprep.subr.mxu0 0.0
      %307 = vmatpush1.msra.mxu0 0.0
      %308 = vmatprep.subr.mxu0 0.0
      %309 = vmatpush1.msra.mxu0 0.0
      %310 = vmatprep.subr.mxu0 0.0
      %311 = vmatpush1.msra.mxu0 0.0
      %312 = vmatprep.subr.mxu0 0.0
      %313 = vmatpush1.msra.mxu0 0.0
      %314 = vmatprep.subr.mxu0 0.0
      %315 = vmatpush1.msra.mxu0 0.0
      %316 = vmatprep.subr.mxu0 0.0
      %317 = vmatpush1.msra.mxu0 0.0
      %318 = vmatprep.subr.mxu0 0.0
      %319 = vmatpush1.msra.mxu0 0.0
      %320 = vmatprep.subr.mxu0 0.0
      %321 = vmatpush1.msra.mxu0 0.0
      %322 = vmatprep.subr.mxu0 0.0
      %323 = vmatpush1.msra.mxu0 0.0
      %324 = vmatprep.subr.mxu0 0.0
      %325 = vmatpush1.msra.mxu0 0.0
      %326 = vmatprep.subr.mxu0 0.0
      %327 = vmatpush1.msra.mxu0 0.0
      %328 = vmatprep.subr.mxu0 0.0
      %329 = vmatpush1.msra.mxu0 0.0
      %330 = vmatprep.subr.mxu0 0.0
      %331 = vmatpush1.msra.mxu0 0.0
      %332 = vmatprep.subr.mxu0 0.0
      %333 = vmatpush1.msra.mxu0 0.0
      %334 = vmatprep.subr.mxu0 0.0
      %335 = vmatpush1.msra.mxu0 0.0
      %336 = vmatprep.subr.mxu0 0.0
      %337 = vmatpush1.msra.mxu0 0.0
      %338 = vmatprep.subr.mxu0 0.0
      %339 = vmatpush1.msra.mxu0 0.0
      %340 = vmatprep.subr.mxu0 0.0
      %341 = vmatpush1.msra.mxu0 0.0
      %342 = vmatprep.subr.mxu0 0.0
      %343 = vmatpush1.msra.mxu0 0.0
      %344 = vmatprep.subr.mxu0 0.0
      %345 = vmatpush1.msra.mxu0 0.0
      %346 = vmatprep.subr.mxu0 0.0
      %347 = vmatpush1.msra.mxu0 0.0
      %348 = vmatprep.subr.mxu0 0.0
      %349 = vmatpush1.msra.mxu0 0.0
      %350 = vmatprep.subr.mxu0 0.0
      %351 = vmatpush1.msra.mxu0 0.0
      %352 = vmatprep.subr.mxu0 0.0
      %353 = vmatpush1.msra.mxu0 0.0
      %354 = vmatprep.subr.mxu0 0.0
      %355 = vmatpush1.msra.mxu0 0.0
      %356 = vmatprep.subr.mxu0 0.0
      %357 = vmatpush1.msra.mxu0 0.0
      %358 = vmatprep.subr.mxu0 0.0
      %359 = vmatpush1.msra.mxu0 0.0
      %360 = vmatprep.subr.mxu0 0.0
      %361 = vmatpush1.msra.mxu0 0.0
      %362 = vmatprep.subr.mxu0 0.0
      %363 = vmatpush1.msra.mxu0 0.0
      %364 = vmatprep.subr.mxu0 0.0
      %365 = vmatpush1.msra.mxu0 0.0
      %366 = vmatprep.mubr.f32.mxu0 0.0
      %367 = vmatmul.mubr.f32.gmra.mrb[0].mxu0 %v229
      %v368 = vpop.f32.mrb[0].mxu0
      %v369 = vadd.f32 0.0, %v368
      %v370 = vpop.f32.mrb[0].mxu0
      %371 = vdwg.mxu0
      %v373 = vsel %vm227, %v201, 0
      %375 = vmatprep.subr.mxu0 %v199
      %376 = vmatpush1.msra.mxu0 %v198
      %377 = vmatprep.subr.mxu0 0.0
      %378 = vmatpush1.msra.mxu0 0.0
      %379 = vmatprep.subr.mxu0 0.0
      %380 = vmatpush1.msra.mxu0 0.0
      %381 = vmatprep.subr.mxu0 0.0
      %382 = vmatpush1.msra.mxu0 0.0
      %383 = vmatprep.subr.mxu0 0.0
      %384 = vmatpush1.msra.mxu0 0.0
      %385 = vmatprep.subr.mxu0 0.0
      %386 = vmatpush1.msra.mxu0 0.0
      %387 = vmatprep.subr.mxu0 0.0
      %388 = vmatpush1.msra.mxu0 0.0
      %389 = vmatprep.subr.mxu0 0.0
      %390 = vmatpush1.msra.mxu0 0.0
      %391 = vmatprep.subr.mxu0 0.0
      %392 = vmatpush1.msra.mxu0 0.0
      %393 = vmatprep.subr.mxu0 0.0
      %394 = vmatpush1.msra.mxu0 0.0
      %395 = vmatprep.subr.mxu0 0.0
      %396 = vmatpush1.msra.mxu0 0.0
      %397 = vmatprep.subr.mxu0 0.0
      %398 = vmatpush1.msra.mxu0 0.0
      %399 = vmatprep.subr.mxu0 0.0
      %400 = vmatpush1.msra.mxu0 0.0
      %401 = vmatprep.subr.mxu0 0.0
      %402 = vmatpush1.msra.mxu0 0.0
      %403 = vmatprep.subr.mxu0 0.0
      %404 = vmatpush1.msra.mxu0 0.0
      %405 = vmatprep.subr.mxu0 0.0
      %406 = vmatpush1.msra.mxu0 0.0
      %407 = vmatprep.subr.mxu0 0.0
      %408 = vmatpush1.msra.mxu0 0.0
      %409 = vmatprep.subr.mxu0 0.0
      %410 = vmatpush1.msra.mxu0 0.0
      %411 = vmatprep.subr.mxu0 0.0
      %412 = vmatpush1.msra.mxu0 0.0
      %413 = vmatprep.subr.mxu0 0.0
      %414 = vmatpush1.msra.mxu0 0.0
      %415 = vmatprep.subr.mxu0 0.0
      %416 = vmatpush1.msra.mxu0 0.0
      %417 = vmatprep.subr.mxu0 0.0
      %418 = vmatpush1.msra.mxu0 0.0
      %419 = vmatprep.subr.mxu0 0.0
      %420 = vmatpush1.msra.mxu0 0.0
      %421 = vmatprep.subr.mxu0 0.0
      %422 = vmatpush1.msra.mxu0 0.0
      %423 = vmatprep.subr.mxu0 0.0
      %424 = vmatpush1.msra.mxu0 0.0
      %425 = vmatprep.subr.mxu0 0.0
      %426 = vmatpush1.msra.mxu0 0.0
      %427 = vmatprep.subr.mxu0 0.0
      %428 = vmatpush1.msra.mxu0 0.0
      %429 = vmatprep.subr.mxu0 0.0
      %430 = vmatpush1.msra.mxu0 0.0
      %431 = vmatprep.subr.mxu0 0.0
      %432 = vmatpush1.msra.mxu0 0.0
      %433 = vmatprep.subr.mxu0 0.0
      %434 = vmatpush1.msra.mxu0 0.0
      %435 = vmatprep.subr.mxu0 0.0
      %436 = vmatpush1.msra.mxu0 0.0
      %437 = vmatprep.subr.mxu0 0.0
      %438 = vmatpush1.msra.mxu0 0.0
      %439 = vmatprep.mubr.f32.mxu0 0.0
      %440 = vmatmul.mubr.f32.gmra.mrb[0].mxu0 %v373
      %v441 = vpop.f32.mrb[0].mxu0
      %v442 = vadd.f32 %v298, %v441
      %v443 = vpop.f32.mrb[0].mxu0
      %v444 = vadd.f32 %v300, %v443
      %445 = vdwg.mxu0
      %446 = vmatprep.subr.mxu0 0.0
      %447 = vmatpush1.msra.mxu0 %v200
      %448 = vmatprep.subr.mxu0 0.0
      %449 = vmatpush1.msra.mxu0 0.0
      %450 = vmatprep.subr.mxu0 0.0
      %451 = vmatpush1.msra.mxu0 0.0
      %452 = vmatprep.subr.mxu0 0.0
      %453 = vmatpush1.msra.mxu0 0.0
      %454 = vmatprep.subr.mxu0 0.0
      %455 = vmatpush1.msra.mxu0 0.0
      %456 = vmatprep.subr.mxu0 0.0
      %457 = vmatpush1.msra.mxu0 0.0
      %458 = vmatprep.subr.mxu0 0.0
      %459 = vmatpush1.msra.mxu0 0.0
      %460 = vmatprep.subr.mxu0 0.0
      %461 = vmatpush1.msra.mxu0 0.0
      %462 = vmatprep.subr.mxu0 0.0
      %463 = vmatpush1.msra.mxu0 0.0
      %464 = vmatprep.subr.mxu0 0.0
      %465 = vmatpush1.msra.mxu0 0.0
      %466 = vmatprep.subr.mxu0 0.0
      %467 = vmatpush1.msra.mxu0 0.0
      %468 = vmatprep.subr.mxu0 0.0
      %469 = vmatpush1.msra.mxu0 0.0
      %470 = vmatprep.subr.mxu0 0.0
      %471 = vmatpush1.msra.mxu0 0.0
      %472 = vmatprep.subr.mxu0 0.0
      %473 = vmatpush1.msra.mxu0 0.0
      %474 = vmatprep.subr.mxu0 0.0
      %475 = vmatpush1.msra.mxu0 0.0
      %476 = vmatprep.subr.mxu0 0.0
      %477 = vmatpush1.msra.mxu0 0.0
      %478 = vmatprep.subr.mxu0 0.0
      %479 = vmatpush1.msra.mxu0 0.0
      %480 = vmatprep.subr.mxu0 0.0
      %481 = vmatpush1.msra.mxu0 0.0
      %482 = vmatprep.subr.mxu0 0.0
      %483 = vmatpush1.msra.mxu0 0.0
      %484 = vmatprep.subr.mxu0 0.0
      %485 = vmatpush1.msra.mxu0 0.0
      %486 = vmatprep.subr.mxu0 0.0
      %487 = vmatpush1.msra.mxu0 0.0
      %488 = vmatprep.subr.mxu0 0.0
      %489 = vmatpush1.msra.mxu0 0.0
      %490 = vmatprep.subr.mxu0 0.0
      %491 = vmatpush1.msra.mxu0 0.0
      %492 = vmatprep.subr.mxu0 0.0
      %493 = vmatpush1.msra.mxu0 0.0
      %494 = vmatprep.subr.mxu0 0.0
      %495 = vmatpush1.msra.mxu0 0.0
      %496 = vmatprep.subr.mxu0 0.0
      %497 = vmatpush1.msra.mxu0 0.0
      %498 = vmatprep.subr.mxu0 0.0
      %499 = vmatpush1.msra.mxu0 0.0
      %500 = vmatprep.subr.mxu0 0.0
      %501 = vmatpush1.msra.mxu0 0.0
      %502 = vmatprep.subr.mxu0 0.0
      %503 = vmatpush1.msra.mxu0 0.0
      %504 = vmatprep.subr.mxu0 0.0
      %505 = vmatpush1.msra.mxu0 0.0
      %506 = vmatprep.subr.mxu0 0.0
      %507 = vmatpush1.msra.mxu0 0.0
      %508 = vmatprep.subr.mxu0 0.0
      %509 = vmatpush1.msra.mxu0 0.0
      %510 = vmatprep.mubr.f32.mxu0 0.0
      %511 = vmatmul.mubr.f32.gmra.mrb[0].mxu0 %v373
      %v512 = vpop.f32.mrb[0].mxu0
      %v513 = vadd.f32 %v369, %v512
      %v514 = vpop.f32.mrb[0].mxu0
      %515 = vdwg.mxu0
      %s516 = scalar_lea.vmem %s1, 16
      %v517 = vld [vmem:[%s516] sm:$0xff]
      %518 = vrot.lane.b32.xlu0 %v202, 126
      %v519 = vpop.permute.xlu0 %518
      %520 = vrot.lane.b32.xlu0 %v203, 126
      %v521 = vpop.permute.xlu0 %520
      %522 = vrot.lane.b32.xlu0 %v204, 126
      %v523 = vpop.permute.xlu0 %522
      %524 = vrot.lane.b32.xlu0 %v205, 126
      %v525 = vpop.permute.xlu0 %524
      %vm526 = vcmask 1031168
      %v527 = vsel %vm526, %v519, %v521
      %v528 = vsel %vm526, %v521, %v523
      %v529 = vsel %vm526, %v523, %v525
      %v534 = vsel %vm227, %v517, 0
      %536 = vmatprep.subr.mxu0 %v528
      %537 = vmatpush1.msra.mxu0 %v527
      %538 = vmatprep.subr.mxu0 0.0
      %539 = vmatpush1.msra.mxu0 0.0
      %540 = vmatprep.subr.mxu0 0.0
      %541 = vmatpush1.msra.mxu0 0.0
      %542 = vmatprep.subr.mxu0 0.0
      %543 = vmatpush1.msra.mxu0 0.0
      %544 = vmatprep.subr.mxu0 0.0
      %545 = vmatpush1.msra.mxu0 0.0
      %546 = vmatprep.subr.mxu0 0.0
      %547 = vmatpush1.msra.mxu0 0.0
      %548 = vmatprep.subr.mxu0 0.0
      %549 = vmatpush1.msra.mxu0 0.0
      %550 = vmatprep.subr.mxu0 0.0
      %551 = vmatpush1.msra.mxu0 0.0
      %552 = vmatprep.subr.mxu0 0.0
      %553 = vmatpush1.msra.mxu0 0.0
      %554 = vmatprep.subr.mxu0 0.0
      %555 = vmatpush1.msra.mxu0 0.0
      %556 = vmatprep.subr.mxu0 0.0
      %557 = vmatpush1.msra.mxu0 0.0
      %558 = vmatprep.subr.mxu0 0.0
      %559 = vmatpush1.msra.mxu0 0.0
      %560 = vmatprep.subr.mxu0 0.0
      %561 = vmatpush1.msra.mxu0 0.0
      %562 = vmatprep.subr.mxu0 0.0
      %563 = vmatpush1.msra.mxu0 0.0
      %564 = vmatprep.subr.mxu0 0.0
      %565 = vmatpush1.msra.mxu0 0.0
      %566 = vmatprep.subr.mxu0 0.0
      %567 = vmatpush1.msra.mxu0 0.0
      %568 = vmatprep.subr.mxu0 0.0
      %569 = vmatpush1.msra.mxu0 0.0
      %570 = vmatprep.subr.mxu0 0.0
      %571 = vmatpush1.msra.mxu0 0.0
      %572 = vmatprep.subr.mxu0 0.0
      %573 = vmatpush1.msra.mxu0 0.0
      %574 = vmatprep.subr.mxu0 0.0
      %575 = vmatpush1.msra.mxu0 0.0
      %576 = vmatprep.subr.mxu0 0.0
      %577 = vmatpush1.msra.mxu0 0.0
      %578 = vmatprep.subr.mxu0 0.0
      %579 = vmatpush1.msra.mxu0 0.0
      %580 = vmatprep.subr.mxu0 0.0
      %581 = vmatpush1.msra.mxu0 0.0
      %582 = vmatprep.subr.mxu0 0.0
      %583 = vmatpush1.msra.mxu0 0.0
      %584 = vmatprep.subr.mxu0 0.0
      %585 = vmatpush1.msra.mxu0 0.0
      %586 = vmatprep.subr.mxu0 0.0
      %587 = vmatpush1.msra.mxu0 0.0
      %588 = vmatprep.subr.mxu0 0.0
      %589 = vmatpush1.msra.mxu0 0.0
      %590 = vmatprep.subr.mxu0 0.0
      %591 = vmatpush1.msra.mxu0 0.0
      %592 = vmatprep.subr.mxu0 0.0
      %593 = vmatpush1.msra.mxu0 0.0
      %594 = vmatprep.subr.mxu0 0.0
      %595 = vmatpush1.msra.mxu0 0.0
      %596 = vmatprep.subr.mxu0 0.0
      %597 = vmatpush1.msra.mxu0 0.0
      %598 = vmatprep.subr.mxu0 0.0
      %599 = vmatpush1.msra.mxu0 0.0
      %600 = vmatprep.mubr.f32.mxu0 0.0
      %601 = vmatmul.mubr.f32.gmra.mrb[0].mxu0 %v534
      %v602 = vpop.f32.mrb[0].mxu0
      %v603 = vadd.f32 0.0, %v602
      %v604 = vpop.f32.mrb[0].mxu0
      %v605 = vadd.f32 0.0, %v604
      %606 = vdwg.mxu0
      %607 = vmatprep.subr.mxu0 0.0
      %608 = vmatpush1.msra.mxu0 %v529
      %609 = vmatprep.subr.mxu0 0.0
      %610 = vmatpush1.msra.mxu0 0.0
      %611 = vmatprep.subr.mxu0 0.0
      %612 = vmatpush1.msra.mxu0 0.0
      %613 = vmatprep.subr.mxu0 0.0
      %614 = vmatpush1.msra.mxu0 0.0
      %615 = vmatprep.subr.mxu0 0.0
      %616 = vmatpush1.msra.mxu0 0.0
      %617 = vmatprep.subr.mxu0 0.0
      %618 = vmatpush1.msra.mxu0 0.0
      %619 = vmatprep.subr.mxu0 0.0
      %620 = vmatpush1.msra.mxu0 0.0
      %621 = vmatprep.subr.mxu0 0.0
      %622 = vmatpush1.msra.mxu0 0.0
      %623 = vmatprep.subr.mxu0 0.0
      %624 = vmatpush1.msra.mxu0 0.0
      %625 = vmatprep.subr.mxu0 0.0
      %626 = vmatpush1.msra.mxu0 0.0
      %627 = vmatprep.subr.mxu0 0.0
      %628 = vmatpush1.msra.mxu0 0.0
      %629 = vmatprep.subr.mxu0 0.0
      %630 = vmatpush1.msra.mxu0 0.0
      %631 = vmatprep.subr.mxu0 0.0
      %632 = vmatpush1.msra.mxu0 0.0
      %633 = vmatprep.subr.mxu0 0.0
      %634 = vmatpush1.msra.mxu0 0.0
      %635 = vmatprep.subr.mxu0 0.0
      %636 = vmatpush1.msra.mxu0 0.0
      %637 = vmatprep.subr.mxu0 0.0
      %638 = vmatpush1.msra.mxu0 0.0
      %639 = vmatprep.subr.mxu0 0.0
      %640 = vmatpush1.msra.mxu0 0.0
      %641 = vmatprep.subr.mxu0 0.0
      %642 = vmatpush1.msra.mxu0 0.0
      %643 = vmatprep.subr.mxu0 0.0
      %644 = vmatpush1.msra.mxu0 0.0
      %645 = vmatprep.subr.mxu0 0.0
      %646 = vmatpush1.msra.mxu0 0.0
      %647 = vmatprep.subr.mxu0 0.0
      %648 = vmatpush1.msra.mxu0 0.0
      %649 = vmatprep.subr.mxu0 0.0
      %650 = vmatpush1.msra.mxu0 0.0
      %651 = vmatprep.subr.mxu0 0.0
      %652 = vmatpush1.msra.mxu0 0.0
      %653 = vmatprep.subr.mxu0 0.0
      %654 = vmatpush1.msra.mxu0 0.0
      %655 = vmatprep.subr.mxu0 0.0
      %656 = vmatpush1.msra.mxu0 0.0
      %657 = vmatprep.subr.mxu0 0.0
      %658 = vmatpush1.msra.mxu0 0.0
      %659 = vmatprep.subr.mxu0 0.0
      %660 = vmatpush1.msra.mxu0 0.0
      %661 = vmatprep.subr.mxu0 0.0
      %662 = vmatpush1.msra.mxu0 0.0
      %663 = vmatprep.subr.mxu0 0.0
      %664 = vmatpush1.msra.mxu0 0.0
      %665 = vmatprep.subr.mxu0 0.0
      %666 = vmatpush1.msra.mxu0 0.0
      %667 = vmatprep.subr.mxu0 0.0
      %668 = vmatpush1.msra.mxu0 0.0
      %669 = vmatprep.subr.mxu0 0.0
      %670 = vmatpush1.msra.mxu0 0.0
      %671 = vmatprep.mubr.f32.mxu0 0.0
      %672 = vmatmul.mubr.f32.gmra.mrb[0].mxu0 %v534
      %v673 = vpop.f32.mrb[0].mxu0
      %v674 = vadd.f32 0.0, %v673
      %v675 = vpop.f32.mrb[0].mxu0
      %676 = vdwg.mxu0
      %v677 = vadd.f32 %v442, %v603
      %v678 = vadd.f32 %v444, %v605
      %v679 = vadd.f32 %v513, %v674
      %s680 = scalar_lea.vmem %s1, 24
      %v681 = vld [vmem:[%s680] sm:$0xff]
      %682 = vrot.lane.b32.xlu0 %v202, 104
      %v683 = vpop.permute.xlu0 %682
      %684 = vrot.lane.b32.xlu0 %v203, 104
      %v685 = vpop.permute.xlu0 %684
      %686 = vrot.lane.b32.xlu0 %v204, 104
      %v687 = vpop.permute.xlu0 %686
      %688 = vrot.lane.b32.xlu0 %v205, 104
      %v689 = vpop.permute.xlu0 %688
      %vm690 = vcmask 850944
      %v691 = vsel %vm690, %v683, %v685
      %v692 = vsel %vm690, %v685, %v687
      %v693 = vsel %vm690, %v687, %v689
      %v698 = vsel %vm227, %v681, 0
      %700 = vmatprep.subr.mxu0 %v692
      %701 = vmatpush1.msra.mxu0 %v691
      %702 = vmatprep.subr.mxu0 0.0
      %703 = vmatpush1.msra.mxu0 0.0
      %704 = vmatprep.subr.mxu0 0.0
      %705 = vmatpush1.msra.mxu0 0.0
      %706 = vmatprep.subr.mxu0 0.0
      %707 = vmatpush1.msra.mxu0 0.0
      %708 = vmatprep.subr.mxu0 0.0
      %709 = vmatpush1.msra.mxu0 0.0
      %710 = vmatprep.subr.mxu0 0.0
      %711 = vmatpush1.msra.mxu0 0.0
      %712 = vmatprep.subr.mxu0 0.0
      %713 = vmatpush1.msra.mxu0 0.0
      %714 = vmatprep.subr.mxu0 0.0
      %715 = vmatpush1.msra.mxu0 0.0
      %716 = vmatprep.subr.mxu0 0.0
      %717 = vmatpush1.msra.mxu0 0.0
      %718 = vmatprep.subr.mxu0 0.0
      %719 = vmatpush1.msra.mxu0 0.0
      %720 = vmatprep.subr.mxu0 0.0
      %721 = vmatpush1.msra.mxu0 0.0
      %722 = vmatprep.subr.mxu0 0.0
      %723 = vmatpush1.msra.mxu0 0.0
      %724 = vmatprep.subr.mxu0 0.0
      %725 = vmatpush1.msra.mxu0 0.0
      %726 = vmatprep.subr.mxu0 0.0
      %727 = vmatpush1.msra.mxu0 0.0
      %728 = vmatprep.subr.mxu0 0.0
      %729 = vmatpush1.msra.mxu0 0.0
      %730 = vmatprep.subr.mxu0 0.0
      %731 = vmatpush1.msra.mxu0 0.0
      %732 = vmatprep.subr.mxu0 0.0
      %733 = vmatpush1.msra.mxu0 0.0
      %734 = vmatprep.subr.mxu0 0.0
      %735 = vmatpush1.msra.mxu0 0.0
      %736 = vmatprep.subr.mxu0 0.0
      %737 = vmatpush1.msra.mxu0 0.0
      %738 = vmatprep.subr.mxu0 0.0
      %739 = vmatpush1.msra.mxu0 0.0
      %740 = vmatprep.subr.mxu0 0.0
      %741 = vmatpush1.msra.mxu0 0.0
      %742 = vmatprep.subr.mxu0 0.0
      %743 = vmatpush1.msra.mxu0 0.0
      %744 = vmatprep.subr.mxu0 0.0
      %745 = vmatpush1.msra.mxu0 0.0
      %746 = vmatprep.subr.mxu0 0.0
      %747 = vmatpush1.msra.mxu0 0.0
      %748 = vmatprep.subr.mxu0 0.0
      %749 = vmatpush1.msra.mxu0 0.0
      %750 = vmatprep.subr.mxu0 0.0
      %751 = vmatpush1.msra.mxu0 0.0
      %752 = vmatprep.subr.mxu0 0.0
      %753 = vmatpush1.msra.mxu0 0.0
      %754 = vmatprep.subr.mxu0 0.0
      %755 = vmatpush1.msra.mxu0 0.0
      %756 = vmatprep.subr.mxu0 0.0
      %757 = vmatpush1.msra.mxu0 0.0
      %758 = vmatprep.subr.mxu0 0.0
      %759 = vmatpush1.msra.mxu0 0.0
      %760 = vmatprep.subr.mxu0 0.0
      %761 = vmatpush1.msra.mxu0 0.0
      %762 = vmatprep.subr.mxu0 0.0
      %763 = vmatpush1.msra.mxu0 0.0
      %764 = vmatprep.mubr.f32.mxu0 0.0
      %765 = vmatmul.mubr.f32.gmra.mrb[0].mxu0 %v698
      %v766 = vpop.f32.mrb[0].mxu0
      %v767 = vadd.f32 0.0, %v766
      %v768 = vpop.f32.mrb[0].mxu0
      %v769 = vadd.f32 0.0, %v768
      %770 = vdwg.mxu0
      %771 = vmatprep.subr.mxu0 0.0
      %772 = vmatpush1.msra.mxu0 %v693
      %773 = vmatprep.subr.mxu0 0.0
      %774 = vmatpush1.msra.mxu0 0.0
      %775 = vmatprep.subr.mxu0 0.0
      %776 = vmatpush1.msra.mxu0 0.0
      %777 = vmatprep.subr.mxu0 0.0
      %778 = vmatpush1.msra.mxu0 0.0
      %779 = vmatprep.subr.mxu0 0.0
      %780 = vmatpush1.msra.mxu0 0.0
      %781 = vmatprep.subr.mxu0 0.0
      %782 = vmatpush1.msra.mxu0 0.0
      %783 = vmatprep.subr.mxu0 0.0
      %784 = vmatpush1.msra.mxu0 0.0
      %785 = vmatprep.subr.mxu0 0.0
      %786 = vmatpush1.msra.mxu0 0.0
      %787 = vmatprep.subr.mxu0 0.0
      %788 = vmatpush1.msra.mxu0 0.0
      %789 = vmatprep.subr.mxu0 0.0
      %790 = vmatpush1.msra.mxu0 0.0
      %791 = vmatprep.subr.mxu0 0.0
      %792 = vmatpush1.msra.mxu0 0.0
      %793 = vmatprep.subr.mxu0 0.0
      %794 = vmatpush1.msra.mxu0 0.0
      %795 = vmatprep.subr.mxu0 0.0
      %796 = vmatpush1.msra.mxu0 0.0
      %797 = vmatprep.subr.mxu0 0.0
      %798 = vmatpush1.msra.mxu0 0.0
      %799 = vmatprep.subr.mxu0 0.0
      %800 = vmatpush1.msra.mxu0 0.0
      %801 = vmatprep.subr.mxu0 0.0
      %802 = vmatpush1.msra.mxu0 0.0
      %803 = vmatprep.subr.mxu0 0.0
      %804 = vmatpush1.msra.mxu0 0.0
      %805 = vmatprep.subr.mxu0 0.0
      %806 = vmatpush1.msra.mxu0 0.0
      %807 = vmatprep.subr.mxu0 0.0
      %808 = vmatpush1.msra.mxu0 0.0
      %809 = vmatprep.subr.mxu0 0.0
      %810 = vmatpush1.msra.mxu0 0.0
      %811 = vmatprep.subr.mxu0 0.0
      %812 = vmatpush1.msra.mxu0 0.0
      %813 = vmatprep.subr.mxu0 0.0
      %814 = vmatpush1.msra.mxu0 0.0
      %815 = vmatprep.subr.mxu0 0.0
      %816 = vmatpush1.msra.mxu0 0.0
      %817 = vmatprep.subr.mxu0 0.0
      %818 = vmatpush1.msra.mxu0 0.0
      %819 = vmatprep.subr.mxu0 0.0
      %820 = vmatpush1.msra.mxu0 0.0
      %821 = vmatprep.subr.mxu0 0.0
      %822 = vmatpush1.msra.mxu0 0.0
      %823 = vmatprep.subr.mxu0 0.0
      %824 = vmatpush1.msra.mxu0 0.0
      %825 = vmatprep.subr.mxu0 0.0
      %826 = vmatpush1.msra.mxu0 0.0
      %827 = vmatprep.subr.mxu0 0.0
      %828 = vmatpush1.msra.mxu0 0.0
      %829 = vmatprep.subr.mxu0 0.0
      %830 = vmatpush1.msra.mxu0 0.0
      %831 = vmatprep.subr.mxu0 0.0
      %832 = vmatpush1.msra.mxu0 0.0
      %833 = vmatprep.subr.mxu0 0.0
      %834 = vmatpush1.msra.mxu0 0.0
      %835 = vmatprep.mubr.f32.mxu0 0.0
      %836 = vmatmul.mubr.f32.gmra.mrb[0].mxu0 %v698
      %v837 = vpop.f32.mrb[0].mxu0
      %v838 = vadd.f32 0.0, %v837
      %v839 = vpop.f32.mrb[0].mxu0
      %840 = vdwg.mxu0
      %v841 = vadd.f32 %v677, %v767
      %v842 = vadd.f32 %v678, %v769
      %v843 = vadd.f32 %v679, %v838
      %s844 = scalar_lea.vmem %s1, 32
      %v845 = vld [vmem:[%s844] sm:$0xff]
      %846 = vrot.lane.b32.xlu0 %v202, 103
      %v847 = vpop.permute.xlu0 %846
      %848 = vrot.lane.b32.xlu0 %v203, 103
      %v849 = vpop.permute.xlu0 %848
      %850 = vrot.lane.b32.xlu0 %v204, 103
      %v851 = vpop.permute.xlu0 %850
      %852 = vrot.lane.b32.xlu0 %v205, 103
      %v853 = vpop.permute.xlu0 %852
      %vm854 = vcmask 842752
      %v855 = vsel %vm854, %v847, %v849
      %v856 = vsel %vm854, %v849, %v851
      %v857 = vsel %vm854, %v851, %v853
      %v862 = vsel %vm227, %v845, 0
      %864 = vmatprep.subr.mxu0 %v856
      %865 = vmatpush1.msra.mxu0 %v855
      %866 = vmatprep.subr.mxu0 0.0
      %867 = vmatpush1.msra.mxu0 0.0
      %868 = vmatprep.subr.mxu0 0.0
      %869 = vmatpush1.msra.mxu0 0.0
      %870 = vmatprep.subr.mxu0 0.0
      %871 = vmatpush1.msra.mxu0 0.0
      %872 = vmatprep.subr.mxu0 0.0
      %873 = vmatpush1.msra.mxu0 0.0
      %874 = vmatprep.subr.mxu0 0.0
      %875 = vmatpush1.msra.mxu0 0.0
      %876 = vmatprep.subr.mxu0 0.0
      %877 = vmatpush1.msra.mxu0 0.0
      %878 = vmatprep.subr.mxu0 0.0
      %879 = vmatpush1.msra.mxu0 0.0
      %880 = vmatprep.subr.mxu0 0.0
      %881 = vmatpush1.msra.mxu0 0.0
      %882 = vmatprep.subr.mxu0 0.0
      %883 = vmatpush1.msra.mxu0 0.0
      %884 = vmatprep.subr.mxu0 0.0
      %885 = vmatpush1.msra.mxu0 0.0
      %886 = vmatprep.subr.mxu0 0.0
      %887 = vmatpush1.msra.mxu0 0.0
      %888 = vmatprep.subr.mxu0 0.0
      %889 = vmatpush1.msra.mxu0 0.0
      %890 = vmatprep.subr.mxu0 0.0
      %891 = vmatpush1.msra.mxu0 0.0
      %892 = vmatprep.subr.mxu0 0.0
      %893 = vmatpush1.msra.mxu0 0.0
      %894 = vmatprep.subr.mxu0 0.0
      %895 = vmatpush1.msra.mxu0 0.0
      %896 = vmatprep.subr.mxu0 0.0
      %897 = vmatpush1.msra.mxu0 0.0
      %898 = vmatprep.subr.mxu0 0.0
      %899 = vmatpush1.msra.mxu0 0.0
      %900 = vmatprep.subr.mxu0 0.0
      %901 = vmatpush1.msra.mxu0 0.0
      %902 = vmatprep.subr.mxu0 0.0
      %903 = vmatpush1.msra.mxu0 0.0
      %904 = vmatprep.subr.mxu0 0.0
      %905 = vmatpush1.msra.mxu0 0.0
      %906 = vmatprep.subr.mxu0 0.0
      %907 = vmatpush1.msra.mxu0 0.0
      %908 = vmatprep.subr.mxu0 0.0
      %909 = vmatpush1.msra.mxu0 0.0
      %910 = vmatprep.subr.mxu0 0.0
      %911 = vmatpush1.msra.mxu0 0.0
      %912 = vmatprep.subr.mxu0 0.0
      %913 = vmatpush1.msra.mxu0 0.0
      %914 = vmatprep.subr.mxu0 0.0
      %915 = vmatpush1.msra.mxu0 0.0
      %916 = vmatprep.subr.mxu0 0.0
      %917 = vmatpush1.msra.mxu0 0.0
      %918 = vmatprep.subr.mxu0 0.0
      %919 = vmatpush1.msra.mxu0 0.0
      %920 = vmatprep.subr.mxu0 0.0
      %921 = vmatpush1.msra.mxu0 0.0
      %922 = vmatprep.subr.mxu0 0.0
      %923 = vmatpush1.msra.mxu0 0.0
      %924 = vmatprep.subr.mxu0 0.0
      %925 = vmatpush1.msra.mxu0 0.0
      %926 = vmatprep.subr.mxu0 0.0
      %927 = vmatpush1.msra.mxu0 0.0
      %928 = vmatprep.mubr.f32.mxu0 0.0
      %929 = vmatmul.mubr.f32.gmra.mrb[0].mxu0 %v862
      %v930 = vpop.f32.mrb[0].mxu0
      %v931 = vadd.f32 0.0, %v930
      %v932 = vpop.f32.mrb[0].mxu0
      %v933 = vadd.f32 0.0, %v932
      %934 = vdwg.mxu0
      %935 = vmatprep.subr.mxu0 0.0
      %936 = vmatpush1.msra.mxu0 %v857
      %937 = vmatprep.subr.mxu0 0.0
      %938 = vmatpush1.msra.mxu0 0.0
      %939 = vmatprep.subr.mxu0 0.0
      %940 = vmatpush1.msra.mxu0 0.0
      %941 = vmatprep.subr.mxu0 0.0
      %942 = vmatpush1.msra.mxu0 0.0
      %943 = vmatprep.subr.mxu0 0.0
      %944 = vmatpush1.msra.mxu0 0.0
      %945 = vmatprep.subr.mxu0 0.0
      %946 = vmatpush1.msra.mxu0 0.0
      %947 = vmatprep.subr.mxu0 0.0
      %948 = vmatpush1.msra.mxu0 0.0
      %949 = vmatprep.subr.mxu0 0.0
      %950 = vmatpush1.msra.mxu0 0.0
      %951 = vmatprep.subr.mxu0 0.0
      %952 = vmatpush1.msra.mxu0 0.0
      %953 = vmatprep.subr.mxu0 0.0
      %954 = vmatpush1.msra.mxu0 0.0
      %955 = vmatprep.subr.mxu0 0.0
      %956 = vmatpush1.msra.mxu0 0.0
      %957 = vmatprep.subr.mxu0 0.0
      %958 = vmatpush1.msra.mxu0 0.0
      %959 = vmatprep.subr.mxu0 0.0
      %960 = vmatpush1.msra.mxu0 0.0
      %961 = vmatprep.subr.mxu0 0.0
      %962 = vmatpush1.msra.mxu0 0.0
      %963 = vmatprep.subr.mxu0 0.0
      %964 = vmatpush1.msra.mxu0 0.0
      %965 = vmatprep.subr.mxu0 0.0
      %966 = vmatpush1.msra.mxu0 0.0
      %967 = vmatprep.subr.mxu0 0.0
      %968 = vmatpush1.msra.mxu0 0.0
      %969 = vmatprep.subr.mxu0 0.0
      %970 = vmatpush1.msra.mxu0 0.0
      %971 = vmatprep.subr.mxu0 0.0
      %972 = vmatpush1.msra.mxu0 0.0
      %973 = vmatprep.subr.mxu0 0.0
      %974 = vmatpush1.msra.mxu0 0.0
      %975 = vmatprep.subr.mxu0 0.0
      %976 = vmatpush1.msra.mxu0 0.0
      %977 = vmatprep.subr.mxu0 0.0
      %978 = vmatpush1.msra.mxu0 0.0
      %979 = vmatprep.subr.mxu0 0.0
      %980 = vmatpush1.msra.mxu0 0.0
      %981 = vmatprep.subr.mxu0 0.0
      %982 = vmatpush1.msra.mxu0 0.0
      %983 = vmatprep.subr.mxu0 0.0
      %984 = vmatpush1.msra.mxu0 0.0
      %985 = vmatprep.subr.mxu0 0.0
      %986 = vmatpush1.msra.mxu0 0.0
      %987 = vmatprep.subr.mxu0 0.0
      %988 = vmatpush1.msra.mxu0 0.0
      %989 = vmatprep.subr.mxu0 0.0
      %990 = vmatpush1.msra.mxu0 0.0
      %991 = vmatprep.subr.mxu0 0.0
      %992 = vmatpush1.msra.mxu0 0.0
      %993 = vmatprep.subr.mxu0 0.0
      %994 = vmatpush1.msra.mxu0 0.0
      %995 = vmatprep.subr.mxu0 0.0
      %996 = vmatpush1.msra.mxu0 0.0
      %997 = vmatprep.subr.mxu0 0.0
      %998 = vmatpush1.msra.mxu0 0.0
      %999 = vmatprep.mubr.f32.mxu0 0.0
      %1000 = vmatmul.mubr.f32.gmra.mrb[0].mxu0 %v862
      %v1001 = vpop.f32.mrb[0].mxu0
      %v1002 = vadd.f32 0.0, %v1001
      %v1003 = vpop.f32.mrb[0].mxu0
      %1004 = vdwg.mxu0
      %v1005 = vadd.f32 %v841, %v931
      %v1006 = vadd.f32 %v842, %v933
      %v1007 = vadd.f32 %v843, %v1002
      %s1008 = scalar_lea.vmem %s1, 40
      %v1009 = vld [vmem:[%s1008] sm:$0xff]
      %1010 = vrot.lane.b32.xlu0 %v202, 102
      %v1011 = vpop.permute.xlu0 %1010
      %1012 = vrot.lane.b32.xlu0 %v203, 102
      %v1013 = vpop.permute.xlu0 %1012
      %1014 = vrot.lane.b32.xlu0 %v204, 102
      %v1015 = vpop.permute.xlu0 %1014
      %1016 = vrot.lane.b32.xlu0 %v205, 102
      %v1017 = vpop.permute.xlu0 %1016
      %vm1018 = vcmask 834560
      %v1019 = vsel %vm1018, %v1011, %v1013
      %v1020 = vsel %vm1018, %v1013, %v1015
      %v1021 = vsel %vm1018, %v1015, %v1017
      %v1026 = vsel %vm227, %v1009, 0
      %1028 = vmatprep.subr.mxu0 %v1020
      %1029 = vmatpush1.msra.mxu0 %v1019
      %1030 = vmatprep.subr.mxu0 0.0
      %1031 = vmatpush1.msra.mxu0 0.0
      %1032 = vmatprep.subr.mxu0 0.0
      %1033 = vmatpush1.msra.mxu0 0.0
      %1034 = vmatprep.subr.mxu0 0.0
      %1035 = vmatpush1.msra.mxu0 0.0
      %1036 = vmatprep.subr.mxu0 0.0
      %1037 = vmatpush1.msra.mxu0 0.0
      %1038 = vmatprep.subr.mxu0 0.0
      %1039 = vmatpush1.msra.mxu0 0.0
      %1040 = vmatprep.subr.mxu0 0.0
      %1041 = vmatpush1.msra.mxu0 0.0
      %1042 = vmatprep.subr.mxu0 0.0
      %1043 = vmatpush1.msra.mxu0 0.0
      %1044 = vmatprep.subr.mxu0 0.0
      %1045 = vmatpush1.msra.mxu0 0.0
      %1046 = vmatprep.subr.mxu0 0.0
      %1047 = vmatpush1.msra.mxu0 0.0
      %1048 = vmatprep.subr.mxu0 0.0
      %1049 = vmatpush1.msra.mxu0 0.0
      %1050 = vmatprep.subr.mxu0 0.0
      %1051 = vmatpush1.msra.mxu0 0.0
      %1052 = vmatprep.subr.mxu0 0.0
      %1053 = vmatpush1.msra.mxu0 0.0
      %1054 = vmatprep.subr.mxu0 0.0
      %1055 = vmatpush1.msra.mxu0 0.0
      %1056 = vmatprep.subr.mxu0 0.0
      %1057 = vmatpush1.msra.mxu0 0.0
      %1058 = vmatprep.subr.mxu0 0.0
      %1059 = vmatpush1.msra.mxu0 0.0
      %1060 = vmatprep.subr.mxu0 0.0
      %1061 = vmatpush1.msra.mxu0 0.0
      %1062 = vmatprep.subr.mxu0 0.0
      %1063 = vmatpush1.msra.mxu0 0.0
      %1064 = vmatprep.subr.mxu0 0.0
      %1065 = vmatpush1.msra.mxu0 0.0
      %1066 = vmatprep.subr.mxu0 0.0
      %1067 = vmatpush1.msra.mxu0 0.0
      %1068 = vmatprep.subr.mxu0 0.0
      %1069 = vmatpush1.msra.mxu0 0.0
      %1070 = vmatprep.subr.mxu0 0.0
      %1071 = vmatpush1.msra.mxu0 0.0
      %1072 = vmatprep.subr.mxu0 0.0
      %1073 = vmatpush1.msra.mxu0 0.0
      %1074 = vmatprep.subr.mxu0 0.0
      %1075 = vmatpush1.msra.mxu0 0.0
      %1076 = vmatprep.subr.mxu0 0.0
      %1077 = vmatpush1.msra.mxu0 0.0
      %1078 = vmatprep.subr.mxu0 0.0
      %1079 = vmatpush1.msra.mxu0 0.0
      %1080 = vmatprep.subr.mxu0 0.0
      %1081 = vmatpush1.msra.mxu0 0.0
      %1082 = vmatprep.subr.mxu0 0.0
      %1083 = vmatpush1.msra.mxu0 0.0
      %1084 = vmatprep.subr.mxu0 0.0
      %1085 = vmatpush1.msra.mxu0 0.0
      %1086 = vmatprep.subr.mxu0 0.0
      %1087 = vmatpush1.msra.mxu0 0.0
      %1088 = vmatprep.subr.mxu0 0.0
      %1089 = vmatpush1.msra.mxu0 0.0
      %1090 = vmatprep.subr.mxu0 0.0
      %1091 = vmatpush1.msra.mxu0 0.0
      %1092 = vmatprep.mubr.f32.mxu0 0.0
      %1093 = vmatmul.mubr.f32.gmra.mrb[0].mxu0 %v1026
      %v1094 = vpop.f32.mrb[0].mxu0
      %v1095 = vadd.f32 0.0, %v1094
      %v1096 = vpop.f32.mrb[0].mxu0
      %v1097 = vadd.f32 0.0, %v1096
      %1098 = vdwg.mxu0
      %1099 = vmatprep.subr.mxu0 0.0
      %1100 = vmatpush1.msra.mxu0 %v1021
      %1101 = vmatprep.subr.mxu0 0.0
      %1102 = vmatpush1.msra.mxu0 0.0
      %1103 = vmatprep.subr.mxu0 0.0
      %1104 = vmatpush1.msra.mxu0 0.0
      %1105 = vmatprep.subr.mxu0 0.0
      %1106 = vmatpush1.msra.mxu0 0.0
      %1107 = vmatprep.subr.mxu0 0.0
      %1108 = vmatpush1.msra.mxu0 0.0
      %1109 = vmatprep.subr.mxu0 0.0
      %1110 = vmatpush1.msra.mxu0 0.0
      %1111 = vmatprep.subr.mxu0 0.0
      %1112 = vmatpush1.msra.mxu0 0.0
      %1113 = vmatprep.subr.mxu0 0.0
      %1114 = vmatpush1.msra.mxu0 0.0
      %1115 = vmatprep.subr.mxu0 0.0
      %1116 = vmatpush1.msra.mxu0 0.0
      %1117 = vmatprep.subr.mxu0 0.0
      %1118 = vmatpush1.msra.mxu0 0.0
      %1119 = vmatprep.subr.mxu0 0.0
      %1120 = vmatpush1.msra.mxu0 0.0
      %1121 = vmatprep.subr.mxu0 0.0
      %1122 = vmatpush1.msra.mxu0 0.0
      %1123 = vmatprep.subr.mxu0 0.0
      %1124 = vmatpush1.msra.mxu0 0.0
      %1125 = vmatprep.subr.mxu0 0.0
      %1126 = vmatpush1.msra.mxu0 0.0
      %1127 = vmatprep.subr.mxu0 0.0
      %1128 = vmatpush1.msra.mxu0 0.0
      %1129 = vmatprep.subr.mxu0 0.0
      %1130 = vmatpush1.msra.mxu0 0.0
      %1131 = vmatprep.subr.mxu0 0.0
      %1132 = vmatpush1.msra.mxu0 0.0
      %1133 = vmatprep.subr.mxu0 0.0
      %1134 = vmatpush1.msra.mxu0 0.0
      %1135 = vmatprep.subr.mxu0 0.0
      %1136 = vmatpush1.msra.mxu0 0.0
      %1137 = vmatprep.subr.mxu0 0.0
      %1138 = vmatpush1.msra.mxu0 0.0
      %1139 = vmatprep.subr.mxu0 0.0
      %1140 = vmatpush1.msra.mxu0 0.0
      %1141 = vmatprep.subr.mxu0 0.0
      %1142 = vmatpush1.msra.mxu0 0.0
      %1143 = vmatprep.subr.mxu0 0.0
      %1144 = vmatpush1.msra.mxu0 0.0
      %1145 = vmatprep.subr.mxu0 0.0
      %1146 = vmatpush1.msra.mxu0 0.0
      %1147 = vmatprep.subr.mxu0 0.0
      %1148 = vmatpush1.msra.mxu0 0.0
      %1149 = vmatprep.subr.mxu0 0.0
      %1150 = vmatpush1.msra.mxu0 0.0
      %1151 = vmatprep.subr.mxu0 0.0
      %1152 = vmatpush1.msra.mxu0 0.0
      %1153 = vmatprep.subr.mxu0 0.0
      %1154 = vmatpush1.msra.mxu0 0.0
      %1155 = vmatprep.subr.mxu0 0.0
      %1156 = vmatpush1.msra.mxu0 0.0
      %1157 = vmatprep.subr.mxu0 0.0
      %1158 = vmatpush1.msra.mxu0 0.0
      %1159 = vmatprep.subr.mxu0 0.0
      %1160 = vmatpush1.msra.mxu0 0.0
      %1161 = vmatprep.subr.mxu0 0.0
      %1162 = vmatpush1.msra.mxu0 0.0
      %1163 = vmatprep.mubr.f32.mxu0 0.0
      %1164 = vmatmul.mubr.f32.gmra.mrb[0].mxu0 %v1026
      %v1165 = vpop.f32.mrb[0].mxu0
      %v1166 = vadd.f32 0.0, %v1165
      %v1167 = vpop.f32.mrb[0].mxu0
      %1168 = vdwg.mxu0
      %v1169 = vadd.f32 %v1005, %v1095
      %v1170 = vadd.f32 %v1006, %v1097
      %v1171 = vadd.f32 %v1007, %v1166
      %s1172 = scalar_lea.vmem %s1, 48
      %v1173 = vld [vmem:[%s1172] sm:$0xff]
      %1174 = vrot.lane.b32.xlu0 %v202, 80
      %v1175 = vpop.permute.xlu0 %1174
      %1176 = vrot.lane.b32.xlu0 %v203, 80
      %v1177 = vpop.permute.xlu0 %1176
      %1178 = vrot.lane.b32.xlu0 %v204, 80
      %v1179 = vpop.permute.xlu0 %1178
      %1180 = vrot.lane.b32.xlu0 %v205, 80
      %v1181 = vpop.permute.xlu0 %1180
      %vm1182 = vcmask 654336
      %v1183 = vsel %vm1182, %v1175, %v1177
      %v1184 = vsel %vm1182, %v1177, %v1179
      %v1185 = vsel %vm1182, %v1179, %v1181
      %v1190 = vsel %vm227, %v1173, 0
      %1192 = vmatprep.subr.mxu0 %v1184
      %1193 = vmatpush1.msra.mxu0 %v1183
      %1194 = vmatprep.subr.mxu0 0.0
      %1195 = vmatpush1.msra.mxu0 0.0
      %1196 = vmatprep.subr.mxu0 0.0
      %1197 = vmatpush1.msra.mxu0 0.0
      %1198 = vmatprep.subr.mxu0 0.0
      %1199 = vmatpush1.msra.mxu0 0.0
      %1200 = vmatprep.subr.mxu0 0.0
      %1201 = vmatpush1.msra.mxu0 0.0
      %1202 = vmatprep.subr.mxu0 0.0
      %1203 = vmatpush1.msra.mxu0 0.0
      %1204 = vmatprep.subr.mxu0 0.0
      %1205 = vmatpush1.msra.mxu0 0.0
      %1206 = vmatprep.subr.mxu0 0.0
      %1207 = vmatpush1.msra.mxu0 0.0
      %1208 = vmatprep.subr.mxu0 0.0
      %1209 = vmatpush1.msra.mxu0 0.0
      %1210 = vmatprep.subr.mxu0 0.0
      %1211 = vmatpush1.msra.mxu0 0.0
      %1212 = vmatprep.subr.mxu0 0.0
      %1213 = vmatpush1.msra.mxu0 0.0
      %1214 = vmatprep.subr.mxu0 0.0
      %1215 = vmatpush1.msra.mxu0 0.0
      %1216 = vmatprep.subr.mxu0 0.0
      %1217 = vmatpush1.msra.mxu0 0.0
      %1218 = vmatprep.subr.mxu0 0.0
      %1219 = vmatpush1.msra.mxu0 0.0
      %1220 = vmatprep.subr.mxu0 0.0
      %1221 = vmatpush1.msra.mxu0 0.0
      %1222 = vmatprep.subr.mxu0 0.0
      %1223 = vmatpush1.msra.mxu0 0.0
      %1224 = vmatprep.subr.mxu0 0.0
      %1225 = vmatpush1.msra.mxu0 0.0
      %1226 = vmatprep.subr.mxu0 0.0
      %1227 = vmatpush1.msra.mxu0 0.0
      %1228 = vmatprep.subr.mxu0 0.0
      %1229 = vmatpush1.msra.mxu0 0.0
      %1230 = vmatprep.subr.mxu0 0.0
      %1231 = vmatpush1.msra.mxu0 0.0
      %1232 = vmatprep.subr.mxu0 0.0
      %1233 = vmatpush1.msra.mxu0 0.0
      %1234 = vmatprep.subr.mxu0 0.0
      %1235 = vmatpush1.msra.mxu0 0.0
      %1236 = vmatprep.subr.mxu0 0.0
      %1237 = vmatpush1.msra.mxu0 0.0
      %1238 = vmatprep.subr.mxu0 0.0
      %1239 = vmatpush1.msra.mxu0 0.0
      %1240 = vmatprep.subr.mxu0 0.0
      %1241 = vmatpush1.msra.mxu0 0.0
      %1242 = vmatprep.subr.mxu0 0.0
      %1243 = vmatpush1.msra.mxu0 0.0
      %1244 = vmatprep.subr.mxu0 0.0
      %1245 = vmatpush1.msra.mxu0 0.0
      %1246 = vmatprep.subr.mxu0 0.0
      %1247 = vmatpush1.msra.mxu0 0.0
      %1248 = vmatprep.subr.mxu0 0.0
      %1249 = vmatpush1.msra.mxu0 0.0
      %1250 = vmatprep.subr.mxu0 0.0
      %1251 = vmatpush1.msra.mxu0 0.0
      %1252 = vmatprep.subr.mxu0 0.0
      %1253 = vmatpush1.msra.mxu0 0.0
      %1254 = vmatprep.subr.mxu0 0.0
      %1255 = vmatpush1.msra.mxu0 0.0
      %1256 = vmatprep.mubr.f32.mxu0 0.0
      %1257 = vmatmul.mubr.f32.gmra.mrb[0].mxu0 %v1190
      %v1258 = vpop.f32.mrb[0].mxu0
      %v1259 = vadd.f32 0.0, %v1258
      %v1260 = vpop.f32.mrb[0].mxu0
      %v1261 = vadd.f32 0.0, %v1260
      %1262 = vdwg.mxu0
      %1263 = vmatprep.subr.mxu0 0.0
      %1264 = vmatpush1.msra.mxu0 %v1185
      %1265 = vmatprep.subr.mxu0 0.0
      %1266 = vmatpush1.msra.mxu0 0.0
      %1267 = vmatprep.subr.mxu0 0.0
      %1268 = vmatpush1.msra.mxu0 0.0
      %1269 = vmatprep.subr.mxu0 0.0
      %1270 = vmatpush1.msra.mxu0 0.0
      %1271 = vmatprep.subr.mxu0 0.0
      %1272 = vmatpush1.msra.mxu0 0.0
      %1273 = vmatprep.subr.mxu0 0.0
      %1274 = vmatpush1.msra.mxu0 0.0
      %1275 = vmatprep.subr.mxu0 0.0
      %1276 = vmatpush1.msra.mxu0 0.0
      %1277 = vmatprep.subr.mxu0 0.0
      %1278 = vmatpush1.msra.mxu0 0.0
      %1279 = vmatprep.subr.mxu0 0.0
      %1280 = vmatpush1.msra.mxu0 0.0
      %1281 = vmatprep.subr.mxu0 0.0
      %1282 = vmatpush1.msra.mxu0 0.0
      %1283 = vmatprep.subr.mxu0 0.0
      %1284 = vmatpush1.msra.mxu0 0.0
      %1285 = vmatprep.subr.mxu0 0.0
      %1286 = vmatpush1.msra.mxu0 0.0
      %1287 = vmatprep.subr.mxu0 0.0
      %1288 = vmatpush1.msra.mxu0 0.0
      %1289 = vmatprep.subr.mxu0 0.0
      %1290 = vmatpush1.msra.mxu0 0.0
      %1291 = vmatprep.subr.mxu0 0.0
      %1292 = vmatpush1.msra.mxu0 0.0
      %1293 = vmatprep.subr.mxu0 0.0
      %1294 = vmatpush1.msra.mxu0 0.0
      %1295 = vmatprep.subr.mxu0 0.0
      %1296 = vmatpush1.msra.mxu0 0.0
      %1297 = vmatprep.subr.mxu0 0.0
      %1298 = vmatpush1.msra.mxu0 0.0
      %1299 = vmatprep.subr.mxu0 0.0
      %1300 = vmatpush1.msra.mxu0 0.0
      %1301 = vmatprep.subr.mxu0 0.0
      %1302 = vmatpush1.msra.mxu0 0.0
      %1303 = vmatprep.subr.mxu0 0.0
      %1304 = vmatpush1.msra.mxu0 0.0
      %1305 = vmatprep.subr.mxu0 0.0
      %1306 = vmatpush1.msra.mxu0 0.0
      %1307 = vmatprep.subr.mxu0 0.0
      %1308 = vmatpush1.msra.mxu0 0.0
      %1309 = vmatprep.subr.mxu0 0.0
      %1310 = vmatpush1.msra.mxu0 0.0
      %1311 = vmatprep.subr.mxu0 0.0
      %1312 = vmatpush1.msra.mxu0 0.0
      %1313 = vmatprep.subr.mxu0 0.0
      %1314 = vmatpush1.msra.mxu0 0.0
      %1315 = vmatprep.subr.mxu0 0.0
      %1316 = vmatpush1.msra.mxu0 0.0
      %1317 = vmatprep.subr.mxu0 0.0
      %1318 = vmatpush1.msra.mxu0 0.0
      %1319 = vmatprep.subr.mxu0 0.0
      %1320 = vmatpush1.msra.mxu0 0.0
      %1321 = vmatprep.subr.mxu0 0.0
      %1322 = vmatpush1.msra.mxu0 0.0
      %1323 = vmatprep.subr.mxu0 0.0
      %1324 = vmatpush1.msra.mxu0 0.0
      %1325 = vmatprep.subr.mxu0 0.0
      %1326 = vmatpush1.msra.mxu0 0.0
      %1327 = vmatprep.mubr.f32.mxu0 0.0
      %1328 = vmatmul.mubr.f32.gmra.mrb[0].mxu0 %v1190
      %v1329 = vpop.f32.mrb[0].mxu0
      %v1330 = vadd.f32 0.0, %v1329
      %v1331 = vpop.f32.mrb[0].mxu0
      %1332 = vdwg.mxu0
      %v1333 = vadd.f32 %v1169, %v1259
      %v1334 = vadd.f32 %v1170, %v1261
      %v1335 = vadd.f32 %v1171, %v1330
      %s1336 = scalar_lea.vmem %s1, 56
      %v1337 = vld [vmem:[%s1336] sm:$0xff]
      %1338 = vrot.lane.b32.xlu0 %v202, 79
      %v1339 = vpop.permute.xlu0 %1338
      %1340 = vrot.lane.b32.xlu0 %v203, 79
      %v1341 = vpop.permute.xlu0 %1340
      %1342 = vrot.lane.b32.xlu0 %v204, 79
      %v1343 = vpop.permute.xlu0 %1342
      %1344 = vrot.lane.b32.xlu0 %v205, 79
      %v1345 = vpop.permute.xlu0 %1344
      %vm1346 = vcmask 646144
      %v1347 = vsel %vm1346, %v1339, %v1341
      %v1348 = vsel %vm1346, %v1341, %v1343
      %v1349 = vsel %vm1346, %v1343, %v1345
      %v1354 = vsel %vm227, %v1337, 0
      %1356 = vmatprep.subr.mxu0 %v1348
      %1357 = vmatpush1.msra.mxu0 %v1347
      %1358 = vmatprep.subr.mxu0 0.0
      %1359 = vmatpush1.msra.mxu0 0.0
      %1360 = vmatprep.subr.mxu0 0.0
      %1361 = vmatpush1.msra.mxu0 0.0
      %1362 = vmatprep.subr.mxu0 0.0
      %1363 = vmatpush1.msra.mxu0 0.0
      %1364 = vmatprep.subr.mxu0 0.0
      %1365 = vmatpush1.msra.mxu0 0.0
      %1366 = vmatprep.subr.mxu0 0.0
      %1367 = vmatpush1.msra.mxu0 0.0
      %1368 = vmatprep.subr.mxu0 0.0
      %1369 = vmatpush1.msra.mxu0 0.0
      %1370 = vmatprep.subr.mxu0 0.0
      %1371 = vmatpush1.msra.mxu0 0.0
      %1372 = vmatprep.subr.mxu0 0.0
      %1373 = vmatpush1.msra.mxu0 0.0
      %1374 = vmatprep.subr.mxu0 0.0
      %1375 = vmatpush1.msra.mxu0 0.0
      %1376 = vmatprep.subr.mxu0 0.0
      %1377 = vmatpush1.msra.mxu0 0.0
      %1378 = vmatprep.subr.mxu0 0.0
      %1379 = vmatpush1.msra.mxu0 0.0
      %1380 = vmatprep.subr.mxu0 0.0
      %1381 = vmatpush1.msra.mxu0 0.0
      %1382 = vmatprep.subr.mxu0 0.0
      %1383 = vmatpush1.msra.mxu0 0.0
      %1384 = vmatprep.subr.mxu0 0.0
      %1385 = vmatpush1.msra.mxu0 0.0
      %1386 = vmatprep.subr.mxu0 0.0
      %1387 = vmatpush1.msra.mxu0 0.0
      %1388 = vmatprep.subr.mxu0 0.0
      %1389 = vmatpush1.msra.mxu0 0.0
      %1390 = vmatprep.subr.mxu0 0.0
      %1391 = vmatpush1.msra.mxu0 0.0
      %1392 = vmatprep.subr.mxu0 0.0
      %1393 = vmatpush1.msra.mxu0 0.0
      %1394 = vmatprep.subr.mxu0 0.0
      %1395 = vmatpush1.msra.mxu0 0.0
      %1396 = vmatprep.subr.mxu0 0.0
      %1397 = vmatpush1.msra.mxu0 0.0
      %1398 = vmatprep.subr.mxu0 0.0
      %1399 = vmatpush1.msra.mxu0 0.0
      %1400 = vmatprep.subr.mxu0 0.0
      %1401 = vmatpush1.msra.mxu0 0.0
      %1402 = vmatprep.subr.mxu0 0.0
      %1403 = vmatpush1.msra.mxu0 0.0
      %1404 = vmatprep.subr.mxu0 0.0
      %1405 = vmatpush1.msra.mxu0 0.0
      %1406 = vmatprep.subr.mxu0 0.0
      %1407 = vmatpush1.msra.mxu0 0.0
      %1408 = vmatprep.subr.mxu0 0.0
      %1409 = vmatpush1.msra.mxu0 0.0
      %1410 = vmatprep.subr.mxu0 0.0
      %1411 = vmatpush1.msra.mxu0 0.0
      %1412 = vmatprep.subr.mxu0 0.0
      %1413 = vmatpush1.msra.mxu0 0.0
      %1414 = vmatprep.subr.mxu0 0.0
      %1415 = vmatpush1.msra.mxu0 0.0
      %1416 = vmatprep.subr.mxu0 0.0
      %1417 = vmatpush1.msra.mxu0 0.0
      %1418 = vmatprep.subr.mxu0 0.0
      %1419 = vmatpush1.msra.mxu0 0.0
      %1420 = vmatprep.mubr.f32.mxu0 0.0
      %1421 = vmatmul.mubr.f32.gmra.mrb[0].mxu0 %v1354
      %v1422 = vpop.f32.mrb[0].mxu0
      %v1423 = vadd.f32 0.0, %v1422
      %v1424 = vpop.f32.mrb[0].mxu0
      %v1425 = vadd.f32 0.0, %v1424
      %1426 = vdwg.mxu0
      %1427 = vmatprep.subr.mxu0 0.0
      %1428 = vmatpush1.msra.mxu0 %v1349
      %1429 = vmatprep.subr.mxu0 0.0
      %1430 = vmatpush1.msra.mxu0 0.0
      %1431 = vmatprep.subr.mxu0 0.0
      %1432 = vmatpush1.msra.mxu0 0.0
      %1433 = vmatprep.subr.mxu0 0.0
      %1434 = vmatpush1.msra.mxu0 0.0
      %1435 = vmatprep.subr.mxu0 0.0
      %1436 = vmatpush1.msra.mxu0 0.0
      %1437 = vmatprep.subr.mxu0 0.0
      %1438 = vmatpush1.msra.mxu0 0.0
      %1439 = vmatprep.subr.mxu0 0.0
      %1440 = vmatpush1.msra.mxu0 0.0
      %1441 = vmatprep.subr.mxu0 0.0
      %1442 = vmatpush1.msra.mxu0 0.0
      %1443 = vmatprep.subr.mxu0 0.0
      %1444 = vmatpush1.msra.mxu0 0.0
      %1445 = vmatprep.subr.mxu0 0.0
      %1446 = vmatpush1.msra.mxu0 0.0
      %1447 = vmatprep.subr.mxu0 0.0
      %1448 = vmatpush1.msra.mxu0 0.0
      %1449 = vmatprep.subr.mxu0 0.0
      %1450 = vmatpush1.msra.mxu0 0.0
      %1451 = vmatprep.subr.mxu0 0.0
      %1452 = vmatpush1.msra.mxu0 0.0
      %1453 = vmatprep.subr.mxu0 0.0
      %1454 = vmatpush1.msra.mxu0 0.0
      %1455 = vmatprep.subr.mxu0 0.0
      %1456 = vmatpush1.msra.mxu0 0.0
      %1457 = vmatprep.subr.mxu0 0.0
      %1458 = vmatpush1.msra.mxu0 0.0
      %1459 = vmatprep.subr.mxu0 0.0
      %1460 = vmatpush1.msra.mxu0 0.0
      %1461 = vmatprep.subr.mxu0 0.0
      %1462 = vmatpush1.msra.mxu0 0.0
      %1463 = vmatprep.subr.mxu0 0.0
      %1464 = vmatpush1.msra.mxu0 0.0
      %1465 = vmatprep.subr.mxu0 0.0
      %1466 = vmatpush1.msra.mxu0 0.0
      %1467 = vmatprep.subr.mxu0 0.0
      %1468 = vmatpush1.msra.mxu0 0.0
      %1469 = vmatprep.subr.mxu0 0.0
      %1470 = vmatpush1.msra.mxu0 0.0
      %1471 = vmatprep.subr.mxu0 0.0
      %1472 = vmatpush1.msra.mxu0 0.0
      %1473 = vmatprep.subr.mxu0 0.0
      %1474 = vmatpush1.msra.mxu0 0.0
      %1475 = vmatprep.subr.mxu0 0.0
      %1476 = vmatpush1.msra.mxu0 0.0
      %1477 = vmatprep.subr.mxu0 0.0
      %1478 = vmatpush1.msra.mxu0 0.0
      %1479 = vmatprep.subr.mxu0 0.0
      %1480 = vmatpush1.msra.mxu0 0.0
      %1481 = vmatprep.subr.mxu0 0.0
      %1482 = vmatpush1.msra.mxu0 0.0
      %1483 = vmatprep.subr.mxu0 0.0
      %1484 = vmatpush1.msra.mxu0 0.0
      %1485 = vmatprep.subr.mxu0 0.0
      %1486 = vmatpush1.msra.mxu0 0.0
      %1487 = vmatprep.subr.mxu0 0.0
      %1488 = vmatpush1.msra.mxu0 0.0
      %1489 = vmatprep.subr.mxu0 0.0
      %1490 = vmatpush1.msra.mxu0 0.0
      %1491 = vmatprep.mubr.f32.mxu0 0.0
      %1492 = vmatmul.mubr.f32.gmra.mrb[0].mxu0 %v1354
      %v1493 = vpop.f32.mrb[0].mxu0
      %v1494 = vadd.f32 0.0, %v1493
      %v1495 = vpop.f32.mrb[0].mxu0
      %1496 = vdwg.mxu0
      %v1497 = vadd.f32 %v1333, %v1423
      %v1498 = vadd.f32 %v1334, %v1425
      %v1499 = vadd.f32 %v1335, %v1494
      %s1500 = scalar_lea.vmem %s1, 64
      %v1501 = vld [vmem:[%s1500] sm:$0xff]
      %1502 = vrot.lane.b32.xlu0 %v202, 78
      %v1503 = vpop.permute.xlu0 %1502
      %1504 = vrot.lane.b32.xlu0 %v203, 78
      %v1505 = vpop.permute.xlu0 %1504
      %1506 = vrot.lane.b32.xlu0 %v204, 78
      %v1507 = vpop.permute.xlu0 %1506
      %1508 = vrot.lane.b32.xlu0 %v205, 78
      %v1509 = vpop.permute.xlu0 %1508
      %vm1510 = vcmask 637952
      %v1511 = vsel %vm1510, %v1503, %v1505
      %v1512 = vsel %vm1510, %v1505, %v1507
      %v1513 = vsel %vm1510, %v1507, %v1509
      %v1518 = vsel %vm227, %v1501, 0
      %1520 = vmatprep.subr.mxu0 %v1512
      %1521 = vmatpush1.msra.mxu0 %v1511
      %1522 = vmatprep.subr.mxu0 0.0
      %1523 = vmatpush1.msra.mxu0 0.0
      %1524 = vmatprep.subr.mxu0 0.0
      %1525 = vmatpush1.msra.mxu0 0.0
      %1526 = vmatprep.subr.mxu0 0.0
      %1527 = vmatpush1.msra.mxu0 0.0
      %1528 = vmatprep.subr.mxu0 0.0
      %1529 = vmatpush1.msra.mxu0 0.0
      %1530 = vmatprep.subr.mxu0 0.0
      %1531 = vmatpush1.msra.mxu0 0.0
      %1532 = vmatprep.subr.mxu0 0.0
      %1533 = vmatpush1.msra.mxu0 0.0
      %1534 = vmatprep.subr.mxu0 0.0
      %1535 = vmatpush1.msra.mxu0 0.0
      %1536 = vmatprep.subr.mxu0 0.0
      %1537 = vmatpush1.msra.mxu0 0.0
      %1538 = vmatprep.subr.mxu0 0.0
      %1539 = vmatpush1.msra.mxu0 0.0
      %1540 = vmatprep.subr.mxu0 0.0
      %1541 = vmatpush1.msra.mxu0 0.0
      %1542 = vmatprep.subr.mxu0 0.0
      %1543 = vmatpush1.msra.mxu0 0.0
      %1544 = vmatprep.subr.mxu0 0.0
      %1545 = vmatpush1.msra.mxu0 0.0
      %1546 = vmatprep.subr.mxu0 0.0
      %1547 = vmatpush1.msra.mxu0 0.0
      %1548 = vmatprep.subr.mxu0 0.0
      %1549 = vmatpush1.msra.mxu0 0.0
      %1550 = vmatprep.subr.mxu0 0.0
      %1551 = vmatpush1.msra.mxu0 0.0
      %1552 = vmatprep.subr.mxu0 0.0
      %1553 = vmatpush1.msra.mxu0 0.0
      %1554 = vmatprep.subr.mxu0 0.0
      %1555 = vmatpush1.msra.mxu0 0.0
      %1556 = vmatprep.subr.mxu0 0.0
      %1557 = vmatpush1.msra.mxu0 0.0
      %1558 = vmatprep.subr.mxu0 0.0
      %1559 = vmatpush1.msra.mxu0 0.0
      %1560 = vmatprep.subr.mxu0 0.0
      %1561 = vmatpush1.msra.mxu0 0.0
      %1562 = vmatprep.subr.mxu0 0.0
      %1563 = vmatpush1.msra.mxu0 0.0
      %1564 = vmatprep.subr.mxu0 0.0
      %1565 = vmatpush1.msra.mxu0 0.0
      %1566 = vmatprep.subr.mxu0 0.0
      %1567 = vmatpush1.msra.mxu0 0.0
      %1568 = vmatprep.subr.mxu0 0.0
      %1569 = vmatpush1.msra.mxu0 0.0
      %1570 = vmatprep.subr.mxu0 0.0
      %1571 = vmatpush1.msra.mxu0 0.0
      %1572 = vmatprep.subr.mxu0 0.0
      %1573 = vmatpush1.msra.mxu0 0.0
      %1574 = vmatprep.subr.mxu0 0.0
      %1575 = vmatpush1.msra.mxu0 0.0
      %1576 = vmatprep.subr.mxu0 0.0
      %1577 = vmatpush1.msra.mxu0 0.0
      %1578 = vmatprep.subr.mxu0 0.0
      %1579 = vmatpush1.msra.mxu0 0.0
      %1580 = vmatprep.subr.mxu0 0.0
      %1581 = vmatpush1.msra.mxu0 0.0
      %1582 = vmatprep.subr.mxu0 0.0
      %1583 = vmatpush1.msra.mxu0 0.0
      %1584 = vmatprep.mubr.f32.mxu0 0.0
      %1585 = vmatmul.mubr.f32.gmra.mrb[0].mxu0 %v1518
      %v1586 = vpop.f32.mrb[0].mxu0
      %v1587 = vadd.f32 0.0, %v1586
      %v1588 = vpop.f32.mrb[0].mxu0
      %v1589 = vadd.f32 0.0, %v1588
      %1590 = vdwg.mxu0
      %1591 = vmatprep.subr.mxu0 0.0
      %1592 = vmatpush1.msra.mxu0 %v1513
      %1593 = vmatprep.subr.mxu0 0.0
      %1594 = vmatpush1.msra.mxu0 0.0
      %1595 = vmatprep.subr.mxu0 0.0
      %1596 = vmatpush1.msra.mxu0 0.0
      %1597 = vmatprep.subr.mxu0 0.0
      %1598 = vmatpush1.msra.mxu0 0.0
      %1599 = vmatprep.subr.mxu0 0.0
      %1600 = vmatpush1.msra.mxu0 0.0
      %1601 = vmatprep.subr.mxu0 0.0
      %1602 = vmatpush1.msra.mxu0 0.0
      %1603 = vmatprep.subr.mxu0 0.0
      %1604 = vmatpush1.msra.mxu0 0.0
      %1605 = vmatprep.subr.mxu0 0.0
      %1606 = vmatpush1.msra.mxu0 0.0
      %1607 = vmatprep.subr.mxu0 0.0
      %1608 = vmatpush1.msra.mxu0 0.0
      %1609 = vmatprep.subr.mxu0 0.0
      %1610 = vmatpush1.msra.mxu0 0.0
      %1611 = vmatprep.subr.mxu0 0.0
      %1612 = vmatpush1.msra.mxu0 0.0
      %1613 = vmatprep.subr.mxu0 0.0
      %1614 = vmatpush1.msra.mxu0 0.0
      %1615 = vmatprep.subr.mxu0 0.0
      %1616 = vmatpush1.msra.mxu0 0.0
      %1617 = vmatprep.subr.mxu0 0.0
      %1618 = vmatpush1.msra.mxu0 0.0
      %1619 = vmatprep.subr.mxu0 0.0
      %1620 = vmatpush1.msra.mxu0 0.0
      %1621 = vmatprep.subr.mxu0 0.0
      %1622 = vmatpush1.msra.mxu0 0.0
      %1623 = vmatprep.subr.mxu0 0.0
      %1624 = vmatpush1.msra.mxu0 0.0
      %1625 = vmatprep.subr.mxu0 0.0
      %1626 = vmatpush1.msra.mxu0 0.0
      %1627 = vmatprep.subr.mxu0 0.0
      %1628 = vmatpush1.msra.mxu0 0.0
      %1629 = vmatprep.subr.mxu0 0.0
      %1630 = vmatpush1.msra.mxu0 0.0
      %1631 = vmatprep.subr.mxu0 0.0
      %1632 = vmatpush1.msra.mxu0 0.0
      %1633 = vmatprep.subr.mxu0 0.0
      %1634 = vmatpush1.msra.mxu0 0.0
      %1635 = vmatprep.subr.mxu0 0.0
      %1636 = vmatpush1.msra.mxu0 0.0
      %1637 = vmatprep.subr.mxu0 0.0
      %1638 = vmatpush1.msra.mxu0 0.0
      %1639 = vmatprep.subr.mxu0 0.0
      %1640 = vmatpush1.msra.mxu0 0.0
      %1641 = vmatprep.subr.mxu0 0.0
      %1642 = vmatpush1.msra.mxu0 0.0
      %1643 = vmatprep.subr.mxu0 0.0
      %1644 = vmatpush1.msra.mxu0 0.0
      %1645 = vmatprep.subr.mxu0 0.0
      %1646 = vmatpush1.msra.mxu0 0.0
      %1647 = vmatprep.subr.mxu0 0.0
      %1648 = vmatpush1.msra.mxu0 0.0
      %1649 = vmatprep.subr.mxu0 0.0
      %1650 = vmatpush1.msra.mxu0 0.0
      %1651 = vmatprep.subr.mxu0 0.0
      %1652 = vmatpush1.msra.mxu0 0.0
      %1653 = vmatprep.subr.mxu0 0.0
      %1654 = vmatpush1.msra.mxu0 0.0
      %1655 = vmatprep.mubr.f32.mxu0 0.0
      %1656 = vmatmul.mubr.f32.gmra.mrb[0].mxu0 %v1518
      %v1657 = vpop.f32.mrb[0].mxu0
      %v1658 = vadd.f32 0.0, %v1657
      %v1659 = vpop.f32.mrb[0].mxu0
      %1660 = vdwg.mxu0
      %v1661 = vadd.f32 %v1497, %v1587
      %v1662 = vadd.f32 %v1498, %v1589
      %v1663 = vadd.f32 %v1499, %v1658
      %v1664 = vld [vmem:[%s2] sm:$0xff]
      %1666 = vset.pattern.permute.xlu0 0
      %1667 = vperm.xlu0 %1666, %v1664
      %v1668 = vpop.permute.xlu0 %1667
      %v1670 = vadd.f32 %v1661, %v1668
      %v1671 = vadd.f32 %v1662, %v1668
      %v1672 = vadd.f32 %v1663, %v1668
      %v1673 = vld [vmem:[%s3] sm:$0xff]
      %v1674 = vld [vmem:[%s3 + $0x8] sm:$0xff]
      %v1675 = vld [vmem:[%s3 + $0x10] sm:$0xff]
      %v1676 = vld [vmem:[%s3 + $0x18] sm:$0xff]
      %v1677 = vld [vmem:[%s3 + $0x20] sm:$0xff]
      %v1678 = vld [vmem:[%s3 + $0x28] sm:$0xff]
      %v1679 = vld [vmem:[%s3 + $0x30] sm:$0xff]
      %v1680 = vld [vmem:[%s3 + $0x38] sm:$0xff]
      %v1681 = vld [vmem:[%s3 + $0x40] sm:$0xff]
      %v1682 = vld [vmem:[%s3 + $0x48] sm:$0xff]
      %v1683 = vld [vmem:[%s3 + $0x50] sm:$0xff]
      %v1684 = vld [vmem:[%s3 + $0x58] sm:$0xff]
      %v1685 = vld [vmem:[%s3 + $0x60] sm:$0xff]
      %v1686 = vld [vmem:[%s3 + $0x68] sm:$0xff]
      %v1687 = vld [vmem:[%s3 + $0x70] sm:$0xff]
      %v1688 = vld [vmem:[%s3 + $0x78] sm:$0xff]
      %v1689 = vmul.f32 %v1670, %v1670
      %1690 = vmatprep.subr.mxu0 0.0
      %1691 = vmatpush1.msra.mxu0 %v1673
      %1692 = vmatprep.subr.mxu0 0.0
      %1693 = vmatpush1.msra.mxu0 %v1674
      %1694 = vmatprep.subr.mxu0 0.0
      %1695 = vmatpush1.msra.mxu0 %v1675
      %1696 = vmatprep.subr.mxu0 0.0
      %1697 = vmatpush1.msra.mxu0 %v1676
      %1698 = vmatprep.subr.mxu0 0.0
      %1699 = vmatpush1.msra.mxu0 %v1677
      %1700 = vmatprep.subr.mxu0 0.0
      %1701 = vmatpush1.msra.mxu0 %v1678
      %1702 = vmatprep.subr.mxu0 0.0
      %1703 = vmatpush1.msra.mxu0 %v1679
      %1704 = vmatprep.subr.mxu0 0.0
      %1705 = vmatpush1.msra.mxu0 %v1680
      %1706 = vmatprep.subr.mxu0 0.0
      %1707 = vmatpush1.msra.mxu0 %v1681
      %1708 = vmatprep.subr.mxu0 0.0
      %1709 = vmatpush1.msra.mxu0 %v1682
      %1710 = vmatprep.subr.mxu0 0.0
      %1711 = vmatpush1.msra.mxu0 %v1683
      %1712 = vmatprep.subr.mxu0 0.0
      %1713 = vmatpush1.msra.mxu0 %v1684
      %1714 = vmatprep.subr.mxu0 0.0
      %1715 = vmatpush1.msra.mxu0 %v1685
      %1716 = vmatprep.subr.mxu0 0.0
      %1717 = vmatpush1.msra.mxu0 %v1686
      %1718 = vmatprep.subr.mxu0 0.0
      %1719 = vmatpush1.msra.mxu0 %v1687
      %1720 = vmatprep.subr.mxu0 0.0
      %1721 = vmatpush1.msra.mxu0 %v1688
      %1722 = vmatprep.subr.mxu0 0.0
      %1723 = vmatpush1.msra.mxu0 0.0
      %1724 = vmatprep.subr.mxu0 0.0
      %1725 = vmatpush1.msra.mxu0 0.0
      %1726 = vmatprep.subr.mxu0 0.0
      %1727 = vmatpush1.msra.mxu0 0.0
      %1728 = vmatprep.subr.mxu0 0.0
      %1729 = vmatpush1.msra.mxu0 0.0
      %1730 = vmatprep.subr.mxu0 0.0
      %1731 = vmatpush1.msra.mxu0 0.0
      %1732 = vmatprep.subr.mxu0 0.0
      %1733 = vmatpush1.msra.mxu0 0.0
      %1734 = vmatprep.subr.mxu0 0.0
      %1735 = vmatpush1.msra.mxu0 0.0
      %1736 = vmatprep.subr.mxu0 0.0
      %1737 = vmatpush1.msra.mxu0 0.0
      %1738 = vmatprep.subr.mxu0 0.0
      %1739 = vmatpush1.msra.mxu0 0.0
      %1740 = vmatprep.subr.mxu0 0.0
      %1741 = vmatpush1.msra.mxu0 0.0
      %1742 = vmatprep.subr.mxu0 0.0
      %1743 = vmatpush1.msra.mxu0 0.0
      %1744 = vmatprep.subr.mxu0 0.0
      %1745 = vmatpush1.msra.mxu0 0.0
      %1746 = vmatprep.subr.mxu0 0.0
      %1747 = vmatpush1.msra.mxu0 0.0
      %1748 = vmatprep.subr.mxu0 0.0
      %1749 = vmatpush1.msra.mxu0 0.0
      %1750 = vmatprep.subr.mxu0 0.0
      %1751 = vmatpush1.msra.mxu0 0.0
      %1752 = vmatprep.subr.mxu0 0.0
      %1753 = vmatpush1.msra.mxu0 0.0
      %1754 = vmatprep.mubr.f32.mxu0 0.0
      %1755 = vmatmul.mubr.f32.gmra.mrb[0].mxu0 %v1689
      %v1756 = vpop.f32.mrb[0].mxu0
      %v1757 = vadd.f32 0.0, %v1756
      %v1758 = vpop.f32.mrb[0].mxu0
      %1759 = vdwg.mxu0
      %v1760 = vrsqrt.pop %v1757
      %v1761 = vmul.f32 %v1757, %v1760
      %vm1762 = vcmp.eq.f32.partialorder %v1757, inf
      %v1763 = vsel %vm1762, %v1757, %v1761
      %vm1764 = vcmp.eq.f32.partialorder %v1757, 0.0
      %v1765 = vand.u32 %v1757, 2147483648
      %v1766 = vsel %vm1764, %v1765, %v1763
      %v1767 = vmul.f32 %v1670, %v1766
      %v1768 = vadd.f32 %v1757, 1.0
      %v1769 = vrcp.pop %v1768
      %v1770 = vmul.f32 %v1767, %v1769
      %1771 = vst [vmem:[%s197] sm:$0xff] %v1770
      %v1772 = vmul.f32 %v1671, %v1671
      %1773 = vmatprep.subr.mxu0 0.0
      %1774 = vmatpush1.msra.mxu0 %v1673
      %1775 = vmatprep.subr.mxu0 0.0
      %1776 = vmatpush1.msra.mxu0 %v1674
      %1777 = vmatprep.subr.mxu0 0.0
      %1778 = vmatpush1.msra.mxu0 %v1675
      %1779 = vmatprep.subr.mxu0 0.0
      %1780 = vmatpush1.msra.mxu0 %v1676
      %1781 = vmatprep.subr.mxu0 0.0
      %1782 = vmatpush1.msra.mxu0 %v1677
      %1783 = vmatprep.subr.mxu0 0.0
      %1784 = vmatpush1.msra.mxu0 %v1678
      %1785 = vmatprep.subr.mxu0 0.0
      %1786 = vmatpush1.msra.mxu0 %v1679
      %1787 = vmatprep.subr.mxu0 0.0
      %1788 = vmatpush1.msra.mxu0 %v1680
      %1789 = vmatprep.subr.mxu0 0.0
      %1790 = vmatpush1.msra.mxu0 %v1681
      %1791 = vmatprep.subr.mxu0 0.0
      %1792 = vmatpush1.msra.mxu0 %v1682
      %1793 = vmatprep.subr.mxu0 0.0
      %1794 = vmatpush1.msra.mxu0 %v1683
      %1795 = vmatprep.subr.mxu0 0.0
      %1796 = vmatpush1.msra.mxu0 %v1684
      %1797 = vmatprep.subr.mxu0 0.0
      %1798 = vmatpush1.msra.mxu0 %v1685
      %1799 = vmatprep.subr.mxu0 0.0
      %1800 = vmatpush1.msra.mxu0 %v1686
      %1801 = vmatprep.subr.mxu0 0.0
      %1802 = vmatpush1.msra.mxu0 %v1687
      %1803 = vmatprep.subr.mxu0 0.0
      %1804 = vmatpush1.msra.mxu0 %v1688
      %1805 = vmatprep.subr.mxu0 0.0
      %1806 = vmatpush1.msra.mxu0 0.0
      %1807 = vmatprep.subr.mxu0 0.0
      %1808 = vmatpush1.msra.mxu0 0.0
      %1809 = vmatprep.subr.mxu0 0.0
      %1810 = vmatpush1.msra.mxu0 0.0
      %1811 = vmatprep.subr.mxu0 0.0
      %1812 = vmatpush1.msra.mxu0 0.0
      %1813 = vmatprep.subr.mxu0 0.0
      %1814 = vmatpush1.msra.mxu0 0.0
      %1815 = vmatprep.subr.mxu0 0.0
      %1816 = vmatpush1.msra.mxu0 0.0
      %1817 = vmatprep.subr.mxu0 0.0
      %1818 = vmatpush1.msra.mxu0 0.0
      %1819 = vmatprep.subr.mxu0 0.0
      %1820 = vmatpush1.msra.mxu0 0.0
      %1821 = vmatprep.subr.mxu0 0.0
      %1822 = vmatpush1.msra.mxu0 0.0
      %1823 = vmatprep.subr.mxu0 0.0
      %1824 = vmatpush1.msra.mxu0 0.0
      %1825 = vmatprep.subr.mxu0 0.0
      %1826 = vmatpush1.msra.mxu0 0.0
      %1827 = vmatprep.subr.mxu0 0.0
      %1828 = vmatpush1.msra.mxu0 0.0
      %1829 = vmatprep.subr.mxu0 0.0
      %1830 = vmatpush1.msra.mxu0 0.0
      %1831 = vmatprep.subr.mxu0 0.0
      %1832 = vmatpush1.msra.mxu0 0.0
      %1833 = vmatprep.subr.mxu0 0.0
      %1834 = vmatpush1.msra.mxu0 0.0
      %1835 = vmatprep.subr.mxu0 0.0
      %1836 = vmatpush1.msra.mxu0 0.0
      %1837 = vmatprep.mubr.f32.mxu0 0.0
      %1838 = vmatmul.mubr.f32.gmra.mrb[0].mxu0 %v1772
      %v1839 = vpop.f32.mrb[0].mxu0
      %v1840 = vadd.f32 0.0, %v1839
      %v1841 = vpop.f32.mrb[0].mxu0
      %1842 = vdwg.mxu0
      %v1843 = vrsqrt.pop %v1840
      %v1844 = vmul.f32 %v1840, %v1843
      %vm1845 = vcmp.eq.f32.partialorder %v1840, inf
      %v1846 = vsel %vm1845, %v1840, %v1844
      %vm1847 = vcmp.eq.f32.partialorder %v1840, 0.0
      %v1848 = vand.u32 %v1840, 2147483648
      %v1849 = vsel %vm1847, %v1848, %v1846
      %v1850 = vmul.f32 %v1671, %v1849
      %v1851 = vadd.f32 %v1840, 1.0
      %v1852 = vrcp.pop %v1851
      %v1853 = vmul.f32 %v1850, %v1852
      %1854 = vst [vmem:[%s197 + $0x8] sm:$0xff] %v1853
      %v1855 = vmul.f32 %v1672, %v1672
      %1856 = vmatprep.subr.mxu0 0.0
      %1857 = vmatpush1.msra.mxu0 %v1673
      %1858 = vmatprep.subr.mxu0 0.0
      %1859 = vmatpush1.msra.mxu0 %v1674
      %1860 = vmatprep.subr.mxu0 0.0
      %1861 = vmatpush1.msra.mxu0 %v1675
      %1862 = vmatprep.subr.mxu0 0.0
      %1863 = vmatpush1.msra.mxu0 %v1676
      %1864 = vmatprep.subr.mxu0 0.0
      %1865 = vmatpush1.msra.mxu0 %v1677
      %1866 = vmatprep.subr.mxu0 0.0
      %1867 = vmatpush1.msra.mxu0 %v1678
      %1868 = vmatprep.subr.mxu0 0.0
      %1869 = vmatpush1.msra.mxu0 %v1679
      %1870 = vmatprep.subr.mxu0 0.0
      %1871 = vmatpush1.msra.mxu0 %v1680
      %1872 = vmatprep.subr.mxu0 0.0
      %1873 = vmatpush1.msra.mxu0 %v1681
      %1874 = vmatprep.subr.mxu0 0.0
      %1875 = vmatpush1.msra.mxu0 %v1682
      %1876 = vmatprep.subr.mxu0 0.0
      %1877 = vmatpush1.msra.mxu0 %v1683
      %1878 = vmatprep.subr.mxu0 0.0
      %1879 = vmatpush1.msra.mxu0 %v1684
      %1880 = vmatprep.subr.mxu0 0.0
      %1881 = vmatpush1.msra.mxu0 %v1685
      %1882 = vmatprep.subr.mxu0 0.0
      %1883 = vmatpush1.msra.mxu0 %v1686
      %1884 = vmatprep.subr.mxu0 0.0
      %1885 = vmatpush1.msra.mxu0 %v1687
      %1886 = vmatprep.subr.mxu0 0.0
      %1887 = vmatpush1.msra.mxu0 %v1688
      %1888 = vmatprep.subr.mxu0 0.0
      %1889 = vmatpush1.msra.mxu0 0.0
      %1890 = vmatprep.subr.mxu0 0.0
      %1891 = vmatpush1.msra.mxu0 0.0
      %1892 = vmatprep.subr.mxu0 0.0
      %1893 = vmatpush1.msra.mxu0 0.0
      %1894 = vmatprep.subr.mxu0 0.0
      %1895 = vmatpush1.msra.mxu0 0.0
      %1896 = vmatprep.subr.mxu0 0.0
      %1897 = vmatpush1.msra.mxu0 0.0
      %1898 = vmatprep.subr.mxu0 0.0
      %1899 = vmatpush1.msra.mxu0 0.0
      %1900 = vmatprep.subr.mxu0 0.0
      %1901 = vmatpush1.msra.mxu0 0.0
      %1902 = vmatprep.subr.mxu0 0.0
      %1903 = vmatpush1.msra.mxu0 0.0
      %1904 = vmatprep.subr.mxu0 0.0
      %1905 = vmatpush1.msra.mxu0 0.0
      %1906 = vmatprep.subr.mxu0 0.0
      %1907 = vmatpush1.msra.mxu0 0.0
      %1908 = vmatprep.subr.mxu0 0.0
      %1909 = vmatpush1.msra.mxu0 0.0
      %1910 = vmatprep.subr.mxu0 0.0
      %1911 = vmatpush1.msra.mxu0 0.0
      %1912 = vmatprep.subr.mxu0 0.0
      %1913 = vmatpush1.msra.mxu0 0.0
      %1914 = vmatprep.subr.mxu0 0.0
      %1915 = vmatpush1.msra.mxu0 0.0
      %1916 = vmatprep.subr.mxu0 0.0
      %1917 = vmatpush1.msra.mxu0 0.0
      %1918 = vmatprep.subr.mxu0 0.0
      %1919 = vmatpush1.msra.mxu0 0.0
      %1920 = vmatprep.mubr.f32.mxu0 0.0
      %1921 = vmatmul.mubr.f32.gmra.mrb[0].mxu0 %v1855
      %v1922 = vpop.f32.mrb[0].mxu0
      %v1923 = vadd.f32 0.0, %v1922
      %v1924 = vpop.f32.mrb[0].mxu0
      %1925 = vdwg.mxu0
      %v1926 = vrsqrt.pop %v1923
      %v1927 = vmul.f32 %v1923, %v1926
      %vm1928 = vcmp.eq.f32.partialorder %v1923, inf
      %v1929 = vsel %vm1928, %v1923, %v1927
      %vm1930 = vcmp.eq.f32.partialorder %v1923, 0.0
      %v1931 = vand.u32 %v1923, 2147483648
      %v1932 = vsel %vm1930, %v1931, %v1929
      %v1933 = vmul.f32 %v1672, %v1932
      %v1934 = vadd.f32 %v1923, 1.0
      %v1935 = vrcp.pop %v1934
      %v1936 = vmul.f32 %v1933, %v1935
      %1937 = vst [vmem:[%s197 + $0x10] sm:$0xff] %v1936
      %p1938 = scmp.lt.s32.totalorder %s15, 1
      %s1939 = scalar_select %p1938, %s15, 1
      %s1940 = smul.addr %s1939, 3
      %s1941 = smul.addr %s1940, 8
      %s1942 = scalar_lea.vmem %s4, %s1941
      // Predicated region
      $region37: #{primary_capsules_forward.1} parent=35 // pred_check
        %p1943 = pneg %p122
      $region38: #{primary_capsules_forward.1} parent=35 // pred_check_branch
        %1945 = sbr.rel (%p1943) target = $region40
      $region39: #{primary_capsules_forward.1} parent=35 // pred_region
        _
      $region40: #{primary_capsules_forward.1} parent=35 // pred_fallthru
        _
    $region36: #{primary_capsules_forward.1} parent=5 // pred_fallthru
      _
    %p1946 = scmp.le.s32.totalorder 2, %s10
    // Predicated region
    $region41: #{primary_capsules_forward.1} parent=5 // pred_check
      %p1947 = pneg %p1946
    $region42: #{primary_capsules_forward.1} parent=5 // pred_check_branch
      %1949 = sbr.rel (%p1947) target = $region44
    $region43: #{primary_capsules_forward.1} parent=5 // pred_region
      %s1950 = ssub.s32 %s10, 2
      // Predicated region
      $region45: #{primary_capsules_forward.1} parent=43 // pred_check
        %p1951 = pneg %p128
      $region46: #{primary_capsules_forward.1} parent=43 // pred_check_branch
        %1953 = sbr.rel (%p1951) target = $region48
      $region47: #{primary_capsules_forward.1} parent=43 // pred_region
        %p1954 = scmp.lt.s32.totalorder %s16, 1
        %s1955 = scalar_select %p1954, %s16, 1
        %s1956 = smul.addr %s1955, 3
        %s1957 = smul.addr %s1956, 8
        %s1958 = scalar_lea.vmem %s4, %s1957
      $region48: #{primary_capsules_forward.1} parent=43 // pred_fallthru
        _
    $region44: #{primary_capsules_forward.1} parent=5 // pred_fallthru
      _
  $region6: #{primary_capsules_forward.1} parent=0 // loop_footer
    %s14 = sadd.s32 1, %s10
  $region7: #{primary_capsules_forward.1} parent=0 // loop_footer_branch
    %9 = sbr.rel target = $region3
  $region8: #{primary_capsules_forward.1} parent=0 // loop_exit
    _

</llo_original>
